<compile_context>
chip_gen: v7x
topology: tpu7x:2x2x1
jax: 0.10.0
libtpu: 0.0.40
codegen_flags: <defaults>
</compile_context>

<pallas_src>
import functools

import jax
import jax.numpy as jnp
from jax import lax
from jax.experimental import pallas as pl
from jax.experimental.pallas import tpu as pltpu

_NEG_BIG = -1e30  # finite "masked" value (avoids inf-inf NaNs in online softmax)
_VMEM_LIMIT = 48 * 1024 * 1024


def _pick_tile(dim, target, align):
    """Largest multiple of `align` <= target dividing dim (else full dim)."""
    if dim <= target:
        return dim
    t = (target // align) * align
    while t >= align and dim % t:
        t -= align
    return t if (t >= align and dim % t == 0) else dim


# ---------------------------------------------------------------------------
# Tiled linear: y = x @ wT + b
# ---------------------------------------------------------------------------
def _linear_f32_kernel(x_ref, w_ref, b_ref, o_ref):
    # f32 output: accumulate directly into the resident output block.
    @pl.when(pl.program_id(2) == 0)
    def _init():
        o_ref[...] = jnp.zeros_like(o_ref)

    o_ref[...] += jnp.dot(x_ref[...], w_ref[...],
                          preferred_element_type=jnp.float32)

    @pl.when(pl.program_id(2) == pl.num_programs(2) - 1)
    def _bias():
        o_ref[...] += b_ref[...]


def _linear_acc_kernel(x_ref, w_ref, b_ref, o_ref, acc_ref):
    # non-f32 output: keep an f32 VMEM accumulator, store once at the end.
    @pl.when(pl.program_id(2) == 0)
    def _init():
        acc_ref[...] = jnp.zeros_like(acc_ref)

    acc_ref[...] += jnp.dot(x_ref[...], w_ref[...],
                            preferred_element_type=jnp.float32)

    @pl.when(pl.program_id(2) == pl.num_programs(2) - 1)
    def _store():
        o_ref[...] = (acc_ref[...] + b_ref[...].astype(jnp.float32)
                      ).astype(o_ref.dtype)


def linear(x2d, wT, b, *, tm=256, tn=512, tk=512):
    # x2d: [M, K], wT: [K, N], b: [1, N]  ->  [M, N]  (matches F.linear)
    M, K = x2d.shape
    K2, N = wT.shape
    assert K == K2 and b.shape == (1, N)

    wT = wT.astype(x2d.dtype)          # F.linear casts weight to x dtype
    b = b.astype(x2d.dtype)

    sub = 8 * max(1, 4 // x2d.dtype.itemsize)   # 8 f32 / 16 bf16 / 32 int8
    tm = _pick_tile(M, tm, sub)
    tn = _pick_tile(N, tn, 128)
    tk = _pick_tile(K, tk, 128)
    grid = (M // tm, N // tn, K // tk)

    f32_out = x2d.dtype == jnp.float32
    kernel = _linear_f32_kernel if f32_out else _linear_acc_kernel
    scratch = [] if f32_out else [pltpu.VMEM((tm, tn), jnp.float32)]

    itemsize = x2d.dtype.itemsize
    cost = pl.CostEstimate(
        flops=2 * M * N * K,
        transcendentals=0,
        bytes_accessed=int(itemsize * (M * K * (N // tn) + K * N * (M // tm)
                                       + M * N + N)),
    )

    return pl.pallas_call(
        kernel,
        out_shape=jax.ShapeDtypeStruct((M, N), x2d.dtype),
        grid_spec=pltpu.PrefetchScalarGridSpec(
            num_scalar_prefetch=0,
            grid=grid,
            in_specs=[
                pl.BlockSpec((tm, tk), lambda i, j, k: (i, k)),
                pl.BlockSpec((tk, tn), lambda i, j, k: (k, j)),
                pl.BlockSpec((1, tn), lambda i, j, k: (0, j)),
            ],
            out_specs=pl.BlockSpec((tm, tn), lambda i, j, k: (i, j)),
            scratch_shapes=scratch,
        ),
        compiler_params=pltpu.CompilerParams(
            dimension_semantics=("parallel", "parallel", "arbitrary"),
            vmem_limit_bytes=_VMEM_LIMIT,
        ),
        cost_estimate=cost,
    )(x2d, wT, b)


# ---------------------------------------------------------------------------
# Flash-style attention over the fused [B, T, 3D] activation.
# Grid = (B, head_group, q_tile, kv_tile); kv_tile is the reduction axis.
# ---------------------------------------------------------------------------
def _attn_kernel(q_ref, k_ref, v_ref, o_ref, m_sc, l_sc, acc_sc, *,
                 heads, head_dim, scale2, causal, t_real, mask_kv):
    tq = q_ref.shape[1]
    tkv = k_ref.shape[1]
    qi = pl.program_id(2)
    ki = pl.program_id(3)

    @pl.when(ki == 0)
    def _init():
        m_sc[...] = jnp.full_like(m_sc, _NEG_BIG)
        l_sc[...] = jnp.zeros_like(l_sc)
        acc_sc[...] = jnp.zeros_like(acc_sc)

    def _compute():
        # Native-dtype operands: bf16 inputs hit the fast MXU path.
        q = q_ref[0]                       # [tq,  heads*Hd]
        k = k_ref[0]                       # [tkv, heads*Hd]
        v = v_ref[0]                       # [tkv, heads*Hd]

        ok = None
        if causal or mask_kv:
            col = ki * tkv + lax.broadcasted_iota(jnp.int32, (tq, tkv), 1)
            if causal:
                row = qi * tq + lax.broadcasted_iota(jnp.int32, (tq, tkv), 0)
                ok = col <= row
            if mask_kv:
                valid = col < t_real
                ok = valid if ok is None else jnp.logical_and(ok, valid)

        for h in range(heads):             # static unroll (2 heads for Hd=64)
            lo, hi = h * head_dim, (h + 1) * head_dim
            # q @ k^T without transposing k; f32 accumulation on the MXU.
            s = lax.dot_general(q[:, lo:hi], k[:, lo:hi],
                                (((1,), (1,)), ((), ())),
                                preferred_element_type=jnp.float32)
            s = s * scale2                  # both Hd**-0.25 scalings, in f32
            if ok is not None:
                s = jnp.where(ok, s, _NEG_BIG)
            m_prev = m_sc[h]                                   # [tq, 1]
            m_new = jnp.maximum(m_prev, jnp.max(s, axis=-1, keepdims=True))
            alpha = jnp.exp(m_prev - m_new)
            p = jnp.exp(s - m_new)                             # f32 (EUP)
            l_sc[h] = alpha * l_sc[h] + jnp.sum(p, axis=-1, keepdims=True)
            acc_sc[:, lo:hi] = alpha * acc_sc[:, lo:hi] + jnp.dot(
                p.astype(v.dtype), v[:, lo:hi],
                preferred_element_type=jnp.float32)
            m_sc[h] = m_new

    if causal:
        # Skip KV tiles that are entirely above the causal diagonal.
        @pl.when(ki * tkv < (qi + 1) * tq)
        def _():
            _compute()
    else:
        _compute()

    @pl.when(ki == pl.num_programs(3) - 1)
    def _finalize():
        for h in range(heads):
            lo, hi = h * head_dim, (h + 1) * head_dim
            denom = l_sc[h]
            r = pl.reciprocal(denom, approx=True)   # EUP slot
            r = r * (2.0 - denom * r)               # one Newton step (~f32)
            acc_sc[:, lo:hi] = acc_sc[:, lo:hi] * r
        # Single 128-lane-dense store.
        o_ref[0] = acc_sc[...].astype(o_ref.dtype)


def attention(qkv, n_head, scale2, causal, *, q_tile=128, kv_tile=128):
    # qkv: [B, T, 3D] with columns laid out as [Q | K | V].  Returns [B, T, D].
    B, T, three_d = qkv.shape
    D = three_d // 3
    head_dim = D // n_head

    # Pack heads so every block is 128 lanes wide (Whisper Hd=64 -> 2 heads).
    hpb = 1
    while (hpb * head_dim) % 128 != 0:
        hpb *= 2
    assert n_head % hpb == 0, "n_head incompatible with 128-lane head packing"
    cw = hpb * head_dim
    G = D // cw                                       # head groups

    tq, tkv = q_tile, kv_tile
    t_pad = -(-T // tq) * tq
    t_pad = -(-t_pad // tkv) * tkv
    if t_pad != T:
        qkv = jnp.pad(qkv, ((0, 0), (0, t_pad - T), (0, 0)))

    grid = (B, G, t_pad // tq, t_pad // tkv)
    kern = functools.partial(_attn_kernel, heads=hpb, head_dim=head_dim,
                             scale2=scale2, causal=causal, t_real=T,
                             mask_kv=(t_pad != T))

    itemsize = qkv.dtype.itemsize
    cost = pl.CostEstimate(
        flops=4 * B * n_head * t_pad * t_pad * head_dim,
        transcendentals=B * n_head * t_pad * t_pad,
        bytes_accessed=int(itemsize * B * t_pad * D
                           * (2 + 2 * (t_pad // tkv) + 1)),
    )

    out = pl.pallas_call(
        kern,
        out_shape=jax.ShapeDtypeStruct((B, t_pad, D), qkv.dtype),
        grid_spec=pltpu.PrefetchScalarGridSpec(
            num_scalar_prefetch=0,
            grid=grid,
            in_specs=[
                pl.BlockSpec((1, tq, cw), lambda b, g, qi, ki: (b, qi, g)),
                pl.BlockSpec((1, tkv, cw),
                             lambda b, g, qi, ki: (b, ki, G + g)),
                pl.BlockSpec((1, tkv, cw),
                             lambda b, g, qi, ki: (b, ki, 2 * G + g)),
            ],
            out_specs=pl.BlockSpec((1, tq, cw), lambda b, g, qi, ki: (b, qi, g)),
            scratch_shapes=[
                pltpu.VMEM((hpb, tq, 1), jnp.float32),   # running max m
                pltpu.VMEM((hpb, tq, 1), jnp.float32),   # running sum l
                pltpu.VMEM((tq, cw), jnp.float32),       # output accumulator
            ],
        ),
        compiler_params=pltpu.CompilerParams(
            dimension_semantics=("parallel", "parallel", "parallel",
                                 "arbitrary"),
            vmem_limit_bytes=_VMEM_LIMIT,
        ),
        cost_estimate=cost,
    )(qkv, qkv, qkv)      # same fused array feeds the Q, K and V BlockSpecs

    return out[:, :T, :] if t_pad != T else out


# ---------------------------------------------------------------------------
# Module wrapper (self-attention: xa=None, kv_cache=None)
# ---------------------------------------------------------------------------
def fuse_qkv_params(wq_T, bq, wk_T, wv_T, bv, wo_T, bo):
    """Build the fused-QKV parameter dict from the module's separate weights."""
    return {
        "w_qkv_T": jnp.concatenate([wq_T, wk_T, wv_T], axis=1),          # [D, 3D]
        "b_qkv": jnp.concatenate([bq, jnp.zeros_like(bq), bv], axis=1),  # K: no bias
        "wo_T": wo_T,
        "bo": bo,
    }


def multi_head_attention(x, params, n_head, causal=True):
    """x: [B, T, D] -> [B, T, D]; Whisper MultiHeadAttention.forward semantics."""
    B, T, D = x.shape
    head_dim = D // n_head
    scale2 = float(head_dim) ** (-0.5)   # (Hd**-0.25 on q) * (Hd**-0.25 on k)

    x2d = x.reshape(B * T, D)
    qkv = linear(x2d, params["w_qkv_T"], params["b_qkv"])        # fused Q|K|V
    ctx = attention(qkv.reshape(B, T, 3 * D), n_head, scale2, causal)
    out = linear(ctx.reshape(B * T, D), params["wo_T"], params["bo"])
    return out.reshape(B, T, D)


# ---------------------------------------------------------------------------
# Pure-JAX reference (mirrors the PyTorch module, separate weights)
# ---------------------------------------------------------------------------
def reference_mha(x, sep, n_head, causal=True):
    B, T, D = x.shape
    Hd = D // n_head
    scale = float(Hd) ** (-0.25)
    q = x @ sep["wq_T"] + sep["bq"]
    k = x @ sep["wk_T"]
    v = x @ sep["wv_T"] + sep["bv"]
    q = q.reshape(B, T, n_head, Hd).transpose(0, 2, 1, 3) * scale
    k = k.reshape(B, T, n_head, Hd).transpose(0, 2, 3, 1) * scale
    v = v.reshape(B, T, n_head, Hd).transpose(0, 2, 1, 3)
    qk = q @ k
    if causal:
        qk = qk + jnp.triu(jnp.full((T, T), -jnp.inf, jnp.float32), k=1)
    w = jax.nn.softmax(qk.astype(jnp.float32), axis=-1).astype(x.dtype)
    wv = (w @ v).transpose(0, 2, 1, 3).reshape(B, T, D)
    return wv @ sep["wo_T"] + sep["bo"]


if __name__ == "__main__":
    # Small but TPU-tile-aligned shapes; Whisper-style head_dim = 64.
    B, T, D, H = 2, 128, 256, 4

    key = jax.random.PRNGKey(0)
    keys = jax.random.split(key, 8)
    s = 0.1
    sep = {
        "wq_T": jax.random.normal(keys[0], (D, D), jnp.float32) * s,
        "bq":   jax.random.normal(keys[1], (1, D), jnp.float32) * s,
        "wk_T": jax.random.normal(keys[2], (D, D), jnp.float32) * s,
        "wv_T": jax.random.normal(keys[3], (D, D), jnp.float32) * s,
        "bv":   jax.random.normal(keys[4], (1, D), jnp.float32) * s,
        "wo_T": jax.random.normal(keys[5], (D, D), jnp.float32) * s,
        "bo":   jax.random.normal(keys[6], (1, D), jnp.float32) * s,
    }
    params = fuse_qkv_params(sep["wq_T"], sep["bq"], sep["wk_T"],
                             sep["wv_T"], sep["bv"], sep["wo_T"], sep["bo"])

    x = jax.random.normal(keys[7], (B, T, D), jnp.float32)

    out = multi_head_attention(x, params, H, causal=True)   # Whisper causal mask
    out = jax.block_until_ready(out)

    ref = reference_mha(x, sep, H, causal=True)
    assert out.shape == (B, T, D)
    err = float(jnp.max(jnp.abs(out - ref)))
    assert err < 2e-3, f"mismatch vs reference: max abs err = {err}"

    # TODO(synk): cross-attention kv_cache path (dict keyed by nn.Module),
    # arbitrary user-supplied additive masks (only the causal / no-mask cases
    # are generated in-kernel), output_attention_weight=True, and the
    # conv/LayerNorm/MLP encoder-decoder stack are not implemented; only the
    # MultiHeadAttention self-attention forward is.
    print("KERNEL_OK")
</pallas_src>

<mosaic_0001>
module attributes {stable_mosaic.version = 11 : i64} {
  func.func @_linear_f32_kernel(%arg0: i32, %arg1: i32, %arg2: i32, %arg3: memref<256x256xf32, #tpu.memory_space<vmem>>, %arg4: memref<256x384xf32, #tpu.memory_space<vmem>>, %arg5: memref<1x384xf32, #tpu.memory_space<vmem>>, %arg6: memref<256x384xf32, #tpu.memory_space<vmem>>) attributes {dimension_semantics = [#tpu.dimension_semantics<parallel>, #tpu.dimension_semantics<parallel>, #tpu.dimension_semantics<arbitrary>], iteration_bounds = array<i64: 1, 2, 1>, scalar_prefetch = 0 : i64, scratch_operands = 0 : i64, tpu.core_type = #tpu.core_type<tc>, window_params = [{transform_indices = @transform_0, window_bounds = array<i64: 256, 256>}, {transform_indices = @transform_1, window_bounds = array<i64: 256, 384>}, {transform_indices = @transform_2, window_bounds = array<i64: 1, 384>}, {transform_indices = @transform_3, window_bounds = array<i64: 256, 384>}]} {
    %c0_i32 = arith.constant 0 : i32
    %0 = arith.cmpi eq, %arg2, %c0_i32 : i32
    %1 = arith.extui %0 : i1 to i32
    %c0_i32_0 = arith.constant 0 : i32
    %2 = arith.cmpi ne, %1, %c0_i32_0 : i32
    scf.if %2 {
      %cst_10 = arith.constant 0.000000e+00 : f32
      %12 = vector.broadcast %cst_10 : f32 to vector<256x384xf32>
      %c0_11 = arith.constant 0 : index
      %c0_12 = arith.constant 0 : index
      %13 = vector.load %arg6[%c0_11, %c0_12] : memref<256x384xf32, #tpu.memory_space<vmem>>, vector<256x384xf32>
      tpu.vector_store %arg6[%c0_11, %c0_12], %12 {strides = array<i32>} : memref<256x384xf32, #tpu.memory_space<vmem>>, vector<256x384xf32>,
    } else {
    }
    %c0 = arith.constant 0 : index
    %c0_1 = arith.constant 0 : index
    %3 = vector.load %arg6[%c0, %c0_1] : memref<256x384xf32, #tpu.memory_space<vmem>>, vector<256x384xf32>
    %c0_2 = arith.constant 0 : index
    %c0_3 = arith.constant 0 : index
    %4 = vector.load %arg3[%c0_2, %c0_3] : memref<256x256xf32, #tpu.memory_space<vmem>>, vector<256x256xf32>
    %c0_4 = arith.constant 0 : index
    %c0_5 = arith.constant 0 : index
    %5 = vector.load %arg4[%c0_4, %c0_5] : memref<256x384xf32, #tpu.memory_space<vmem>>, vector<256x384xf32>
    %cst = arith.constant dense<0.000000e+00> : vector<256x384xf32>
    %6 = tpu.matmul %4, %5, %cst {dimension_numbers = #tpu.dot_dimension_numbers<[1], [0], [0], [1], [0, 0, 1, 1], [], []>} : vector<256x256xf32>, vector<256x384xf32>, vector<256x384xf32> -> vector<256x384xf32>
    %7 = arith.addf %3, %6 : vector<256x384xf32>
    %c0_6 = arith.constant 0 : index
    %c0_7 = arith.constant 0 : index
    %8 = vector.load %arg6[%c0_6, %c0_7] : memref<256x384xf32, #tpu.memory_space<vmem>>, vector<256x384xf32>
    tpu.vector_store %arg6[%c0_6, %c0_7], %7 {strides = array<i32>} : memref<256x384xf32, #tpu.memory_space<vmem>>, vector<256x384xf32>,
    %c0_i32_8 = arith.constant 0 : i32
    %9 = arith.cmpi eq, %arg2, %c0_i32_8 : i32
    %10 = arith.extui %9 : i1 to i32
    %c0_i32_9 = arith.constant 0 : i32
    %11 = arith.cmpi ne, %10, %c0_i32_9 : i32
    scf.if %11 {
      %c0_10 = arith.constant 0 : index
      %c0_11 = arith.constant 0 : index
      %12 = vector.load %arg6[%c0_10, %c0_11] : memref<256x384xf32, #tpu.memory_space<vmem>>, vector<256x384xf32>
      %c0_12 = arith.constant 0 : index
      %c0_13 = arith.constant 0 : index
      %13 = vector.load %arg5[%c0_12, %c0_13] : memref<1x384xf32, #tpu.memory_space<vmem>>, vector<1x384xf32>
      %14 = vector.broadcast %13 : vector<1x384xf32> to vector<256x384xf32>
      %15 = arith.addf %12, %14 : vector<256x384xf32>
      %c0_14 = arith.constant 0 : index
      %c0_15 = arith.constant 0 : index
      %16 = vector.load %arg6[%c0_14, %c0_15] : memref<256x384xf32, #tpu.memory_space<vmem>>, vector<256x384xf32>
      tpu.vector_store %arg6[%c0_14, %c0_15], %15 {strides = array<i32>} : memref<256x384xf32, #tpu.memory_space<vmem>>, vector<256x384xf32>,
    } else {
    }
    return
  }
  func.func @transform_0(%arg0: i32, %arg1: i32, %arg2: i32) -> (i32, i32) {
    %c0_i32 = arith.constant 0 : i32
    return %arg0, %arg2 : i32, i32
  }
  func.func @transform_1(%arg0: i32, %arg1: i32, %arg2: i32) -> (i32, i32) {
    %c0_i32 = arith.constant 0 : i32
    return %arg2, %arg1 : i32, i32
  }
  func.func @transform_2(%arg0: i32, %arg1: i32, %arg2: i32) -> (i32, i32) {
    %c0_i32 = arith.constant 0 : i32
    %c0_i32_0 = arith.constant 0 : i32
    return %c0_i32, %arg1 : i32, i32
  }
  func.func @transform_3(%arg0: i32, %arg1: i32, %arg2: i32) -> (i32, i32) {
    %c0_i32 = arith.constant 0 : i32
    return %arg0, %arg1 : i32, i32
  }
}

</mosaic_0001>

<llo_original>
// kernel: tpu_custom_call.1
$region0: #{tpu_custom_call.1}
  #allocation0 [shape = 'u32[]', space=smem, size = 0x4, offset = 0x4, fixed_abs, tag = 'smem constant byte address 0x4 - core index']
  #allocation1 [shape = 'u32[144,128]{1,0:T(1,128)}', space=vmem, size = 0x12000, scoped, tag = 'internal scratch']
  %s0 = inlined_call_operand.hbm [shape: f32[256,256], index: 0, kind: input, shape index: {}]
  %s1 = inlined_call_operand.hbm [shape: f32[256,768], index: 1, kind: input, shape index: {}]
  %s2 = inlined_call_operand.vmem [shape: f32[1,768], index: 2, kind: input, shape index: {}]
  %s3 = inlined_call_operand.hbm [shape: f32[256,768], index: 3, kind: output, shape index: {}]
  %s4 = sld [smem:[#allocation0]]
  $region61: #{tpu_custom_call.1} parent=0
    _
  %s6 = ssub.s32 1, %s4
  %s7 = scalar_select 0, %s6, %s4
  $region1: #{tpu_custom_call.1} parent=0
    #allocation2 [shape = 'u8[262144]{0}', space=vmem, size = 0x40000, scoped, tag = 'input window, operand 0, single buffered']
    #allocation3 [shape = 's32[2]{0}', space=sflag, size = 0x8, scoped, tag = 'scoped memory for tpu_custom_call.1']
    #allocation4 [shape = 's32[2]{0}', space=sflag, size = 0x8, scoped, tag = 'scoped memory for tpu_custom_call.1']
    #allocation5 [shape = 'u8[786432]{0}', space=vmem, size = 0xc0000, scoped, tag = 'input window, operand 1']
    #allocation6 [shape = 's32[2]{0}', space=sflag, size = 0x8, scoped, tag = 'scoped memory for tpu_custom_call.1']
    #allocation7 [shape = 'u8[786432]{0}', space=vmem, size = 0xc0000, scoped, tag = 'output window, operand 0']
    %8 = vsyncpa [#allocation3], 0
    %9 = vsyncpa [#allocation6], 0
    %s10 = scalar_lea.sflag [#allocation6], 1
    %11 = vsyncpa %s10, 0
    %12 = vsyncpa [#allocation4], 0
    %s13 = scalar_lea.sflag [#allocation4], 1
    %14 = vsyncpa %s13, 0
    loop: start=0, step=1, limit=4
    $region2: #{tpu_custom_call.1} parent=1 // loop_pre_header
      _
    $region3: #{tpu_custom_call.1} parent=1 // loop_header
      %s16 = sphi 0, %s20
      %p17 = scmp.ge.s32.totalorder %s16, 4
      %s23 = sphi 0, %s42
      %s24 = sphi 0, %s38
      %s25 = sphi 0, %s34
      %s26 = sphi 0, %s23
      %s27 = sphi 0, %s24
      %s28 = sphi 0, %s25
      %s29 = sphi 0, %s26
      %s30 = sphi 0, %s27
      %s31 = sphi 0, %s28
      %s47 = sphi 0, %s49
      %s50 = sphi 0, %s47
      %s51 = sphi 0, %s50
      %s67 = sphi 0, %s51
      %s75 = sphi 0, %s77
      %s78 = sphi 0, %s75
      %s79 = sphi 0, %s78
      %s95 = sphi 0, %s79
      %s101 = sphi 0, %s103
      %s104 = sphi 0, %s101
      %s105 = sphi 0, %s104
      %s121 = sphi 0, %s105
      %s129 = sphi 0, %s131
      %s132 = sphi 0, %s129
      %s133 = sphi 0, %s132
      %s149 = sphi 0, %s133
    $region4: #{tpu_custom_call.1} parent=1 // loop_header_branch
      %19 = sbr.rel (%p17) target = $region8
    $region5: #{tpu_custom_call.1} parent=1 // loop_body
      %s21 = ssub.s32 %s16, 1
      %s22 = ssub.s32 %s16, 2
      %s32 = sadd.s32 1, %s25
      %p33 = scmp.ge.s32.totalorder %s32, 1
      %s34 = scalar_select %p33, 0, %s32
      %s35 = sadd.s32 1, %s24
      %s36 = scalar_select %p33, %s35, %s24
      %p37 = scmp.ge.s32.totalorder %s36, 2
      %s38 = scalar_select %p37, 0, %s36
      %s39 = sadd.s32 1, %s23
      %s40 = scalar_select %p37, %s39, %s23
      %p41 = scmp.ge.s32.totalorder %s40, 1
      %s42 = scalar_select %p41, 0, %s40
      %s43 = ssub.s32 %s23, %s42
      %s44 = ssub.s32 %s25, %s34
      %s45 = sor.u32 %s43, %s44
      %p46 = scmp.eq.s32.totalorder %s45, 0
      %s48 = sadd.s32 %s47, 1
      %s49 = scalar_select %p46, %s47, %s48
      %p52 = pneg %p46
      %p53 = scmp.eq.s32.totalorder %s16, 1
      %p54 = por %p52, %p53
      %p55 = scmp.ne.s32.totalorder %s47, %s50
      %p56 = scmp.eq.s32.totalorder %s16, 0
      %p57 = por %p55, %p56
      %p58 = scmp.ne.s32.totalorder %s47, %s50
      %p59 = scmp.eq.s32.totalorder %s21, 1
      %p60 = por %p58, %p59
      %p61 = scmp.ne.s32.totalorder %s50, %s51
      %p62 = scmp.eq.s32.totalorder %s21, 0
      %p63 = por %p61, %p62
      %p64 = scmp.ne.s32.totalorder %s50, %s51
      %p65 = scmp.eq.s32.totalorder %s22, 1
      %p66 = por %p64, %p65
      %p68 = scmp.ne.s32.totalorder %s51, %s67
      %p69 = scmp.eq.s32.totalorder %s22, 0
      %p70 = por %p68, %p69
      %s71 = ssub.s32 %s25, %s34
      %s72 = ssub.s32 %s24, %s38
      %s73 = sor.u32 %s71, %s72
      %p74 = scmp.eq.s32.totalorder %s73, 0
      %s76 = sadd.s32 %s75, 1
      %s77 = scalar_select %p74, %s75, %s76
      %p80 = pneg %p74
      %p81 = scmp.eq.s32.totalorder %s16, 1
      %p82 = por %p80, %p81
      %p83 = scmp.ne.s32.totalorder %s75, %s78
      %p84 = scmp.eq.s32.totalorder %s16, 0
      %p85 = por %p83, %p84
      %p86 = scmp.ne.s32.totalorder %s75, %s78
      %p87 = scmp.eq.s32.totalorder %s21, 1
      %p88 = por %p86, %p87
      %p89 = scmp.ne.s32.totalorder %s78, %s79
      %p90 = scmp.eq.s32.totalorder %s21, 0
      %p91 = por %p89, %p90
      %p92 = scmp.ne.s32.totalorder %s78, %s79
      %p93 = scmp.eq.s32.totalorder %s22, 1
      %p94 = por %p92, %p93
      %p96 = scmp.ne.s32.totalorder %s79, %s95
      %p97 = scmp.eq.s32.totalorder %s22, 0
      %p98 = por %p96, %p97
      %s99 = ssub.s32 %s24, %s38
      %p100 = scmp.eq.s32.totalorder %s99, 0
      %s102 = sadd.s32 %s101, 1
      %s103 = scalar_select %p100, %s101, %s102
      %p106 = pneg %p100
      %p107 = scmp.eq.s32.totalorder %s16, 1
      %p108 = por %p106, %p107
      %p109 = scmp.ne.s32.totalorder %s101, %s104
      %p110 = scmp.eq.s32.totalorder %s16, 0
      %p111 = por %p109, %p110
      %p112 = scmp.ne.s32.totalorder %s101, %s104
      %p113 = scmp.eq.s32.totalorder %s21, 1
      %p114 = por %p112, %p113
      %p115 = scmp.ne.s32.totalorder %s104, %s105
      %p116 = scmp.eq.s32.totalorder %s21, 0
      %p117 = por %p115, %p116
      %p118 = scmp.ne.s32.totalorder %s104, %s105
      %p119 = scmp.eq.s32.totalorder %s22, 1
      %p120 = por %p118, %p119
      %p122 = scmp.ne.s32.totalorder %s105, %s121
      %p123 = scmp.eq.s32.totalorder %s22, 0
      %p124 = por %p122, %p123
      %s125 = ssub.s32 %s23, %s42
      %s126 = ssub.s32 %s24, %s38
      %s127 = sor.u32 %s125, %s126
      %p128 = scmp.eq.s32.totalorder %s127, 0
      %s130 = sadd.s32 %s129, 1
      %s131 = scalar_select %p128, %s129, %s130
      %p134 = pneg %p128
      %p135 = scmp.eq.s32.totalorder %s16, 1
      %p136 = por %p134, %p135
      %p137 = scmp.ne.s32.totalorder %s129, %s132
      %p138 = scmp.eq.s32.totalorder %s16, 0
      %p139 = por %p137, %p138
      %p140 = scmp.ne.s32.totalorder %s129, %s132
      %p141 = scmp.eq.s32.totalorder %s21, 1
      %p142 = por %p140, %p141
      %p143 = scmp.ne.s32.totalorder %s132, %s133
      %p144 = scmp.eq.s32.totalorder %s21, 0
      %p145 = por %p143, %p144
      %p146 = scmp.ne.s32.totalorder %s132, %s133
      %p147 = scmp.eq.s32.totalorder %s22, 1
      %p148 = por %p146, %p147
      %p150 = scmp.ne.s32.totalorder %s133, %s149
      %p151 = scmp.eq.s32.totalorder %s22, 0
      %p152 = por %p150, %p151
      %p153 = scmp.le.s32.totalorder 1, %s16
      %p154 = scmp.lt.s32.totalorder %s16, 3
      %p155 = pnand %p153, %p154
      %p156 = pneg %p155
      // Predicated region
      $region9: #{tpu_custom_call.1} parent=5 // pred_check
        _
      $region10: #{tpu_custom_call.1} parent=5 // pred_check_branch
        %158 = sbr.rel (%p155) target = $region12
      $region11: #{tpu_custom_call.1} parent=5 // pred_region
        %s159 = ssub.s32 %s16, 1
        // Predicated region
        $region13: #{tpu_custom_call.1} parent=11 // pred_check
          %p160 = pneg %p63
        $region14: #{tpu_custom_call.1} parent=11 // pred_check_branch
          %162 = sbr.rel (%p160) target = $region16
        $region15: #{tpu_custom_call.1} parent=11 // pred_region
          %s163 = smul.u32 32, %s26
          %s164 = smul.u32 2, %s28
          %s166 = ssub.s32 8192, 8192
          %167 = vsyncadd [#allocation3], %s166
          %s168 = smul.addr %s163, 2
          %s169 = sadd.s32 %s164, %s168
          %s170 = smul.addr %s169, 128
          %s171 = scalar_lea.hbm %s0, %s170
          %s172 = sshll.u32 [#allocation2], 4
          %s173 = int_to_ptr.vmem [resolvable:$true] %s172
          %178 = dma.hbm_to_vmem [thread:$0]  %s171, 8192, %s173, [#allocation3], 256, 256, 16
        $region16: #{tpu_custom_call.1} parent=11 // pred_fallthru
          _
      $region12: #{tpu_custom_call.1} parent=5 // pred_fallthru
        _
      %p179 = scmp.lt.s32.totalorder %s16, 2
      // Predicated region
      $region17: #{tpu_custom_call.1} parent=5 // pred_check
        %p180 = pneg %p179
      $region18: #{tpu_custom_call.1} parent=5 // pred_check_branch
        %182 = sbr.rel (%p180) target = $region20
      $region19: #{tpu_custom_call.1} parent=5 // pred_region
        // Predicated region
        $region21: #{tpu_custom_call.1} parent=19 // pred_check
          %p183 = pneg %p85
        $region22: #{tpu_custom_call.1} parent=19 // pred_check_branch
          %185 = sbr.rel (%p183) target = $region24
        $region23: #{tpu_custom_call.1} parent=19 // pred_region
          %s186 = sand.u32 %s75, 1
          %s187 = scalar_lea.sflag [#allocation6], %s186
          %s188 = sand.u32 %s75, 1
          %s189 = smul.addr %s188, 768
          %s190 = scalar_lea.vmem [#allocation5], %s189
          %s191 = smul.u32 32, %s25
          %s192 = smul.u32 3, %s24
          %s194 = ssub.s32 12288, 12288
          %195 = vsyncadd %s187, %s194
          %s196 = smul.addr %s191, 6
          %s197 = sadd.s32 %s192, %s196
          %s198 = smul.addr %s197, 128
          %s199 = scalar_lea.hbm %s1, %s198
          %s200 = sshll.u32 %s190, 4
          %s201 = int_to_ptr.vmem [resolvable:$true] %s200
          %206 = dma.hbm_to_vmem [thread:$0]  %s199, 12288, %s201, %s187, 768, 384, 24
        $region24: #{tpu_custom_call.1} parent=19 // pred_fallthru
          _
        // Predicated region
        $region25: #{tpu_custom_call.1} parent=19 // pred_check
          %p207 = pneg %p111
        $region26: #{tpu_custom_call.1} parent=19 // pred_check_branch
          %209 = sbr.rel (%p207) target = $region28
        $region27: #{tpu_custom_call.1} parent=19 // pred_region
          %s210 = smul.u32 3, %s24
          %p211 = scmp.lt.s32.totalorder %s210, 5
          %s212 = scalar_select %p211, %s210, 5
          %s213 = scalar_lea.vmem %s2, %s212
          %s214 = smul.u32 3, %s24
        $region28: #{tpu_custom_call.1} parent=19 // pred_fallthru
          _
      $region20: #{tpu_custom_call.1} parent=5 // pred_fallthru
        _
      %p215 = scmp.le.s32.totalorder 1, %s16
      %p216 = scmp.lt.s32.totalorder %s16, 3
      %p217 = pnand %p215, %p216
      %p218 = pneg %p217
      // Predicated region
      $region29: #{tpu_custom_call.1} parent=5 // pred_check
        _
      $region30: #{tpu_custom_call.1} parent=5 // pred_check_branch
        %220 = sbr.rel (%p217) target = $region32
      $region31: #{tpu_custom_call.1} parent=5 // pred_region
        %s221 = ssub.s32 %s16, 1
        // Predicated region
        $region33: #{tpu_custom_call.1} parent=31 // pred_check
          %p222 = pneg %p63
        $region34: #{tpu_custom_call.1} parent=31 // pred_check_branch
          %224 = sbr.rel (%p222) target = $region36
        $region35: #{tpu_custom_call.1} parent=31 // pred_region
          %225 = dma.done [#allocation3], 8192
        $region36: #{tpu_custom_call.1} parent=31 // pred_fallthru
          _
        %s226 = sand.u32 %s78, 1
        %s227 = scalar_lea.sflag [#allocation6], %s226
        %s228 = sand.u32 %s78, 1
        %s229 = smul.addr %s228, 768
        %s230 = scalar_lea.vmem [#allocation5], %s229
        // Predicated region
        $region37: #{tpu_custom_call.1} parent=31 // pred_check
          %p231 = pneg %p91
        $region38: #{tpu_custom_call.1} parent=31 // pred_check_branch
          %233 = sbr.rel (%p231) target = $region40
        $region39: #{tpu_custom_call.1} parent=31 // pred_region
          %234 = dma.done %s227, 12288
        $region40: #{tpu_custom_call.1} parent=31 // pred_fallthru
          _
        %p235 = pneg %p63
        %p236 = pneg %p60
        %s237 = sand.u32 %s78, 1
        %s238 = scalar_lea.sflag [#allocation6], %s237
        %s239 = sand.u32 %s78, 1
        %s240 = smul.addr %s239, 768
        %s241 = scalar_lea.vmem [#allocation5], %s240
        %p242 = pneg %p91
        %p243 = pneg %p88
        %s244 = smul.u32 3, %s27
        %p245 = scmp.lt.s32.totalorder %s244, 5
        %s246 = scalar_select %p245, %s244, 5
        %s247 = scalar_lea.vmem %s2, %s246
        %p248 = pneg %p117
        %p249 = pneg %p114
        %p250 = pneg %p145
        %p251 = pneg %p142
        %s252 = sand.u32 %s132, 1
        %s253 = scalar_lea.sflag [#allocation4], %s252
        %s254 = sand.u32 %s132, 1
        %s255 = smul.addr %s254, 768
        %s256 = scalar_lea.vmem [#allocation7], %s255
        %s257 = smul.u32 32, %s26
        %s258 = smul.u32 2, %s28
        %s259 = smul.u32 32, %s28
        %s260 = smul.u32 3, %s27
        %s261 = smul.u32 3, %s27
        %p262 = scmp.lt.s32.totalorder %s261, 5
        %s263 = scalar_select %p262, %s261, 5
        %s264 = scalar_lea.vmem %s2, %s263
        %s265 = smul.u32 3, %s27
        %s266 = smul.u32 32, %s26
        %s267 = smul.u32 3, %s27
        %p268 = scmp.eq.s32.totalorder %s28, 0
        // Predicated region
        $region41: #{tpu_custom_call.1} parent=31 // pred_check
          %p269 = pneg %p268
        $region42: #{tpu_custom_call.1} parent=31 // pred_check_branch
          %271 = sbr.rel (%p269) target = $region44
        $region43: #{tpu_custom_call.1} parent=31 // pred_region
          %272 = vst [vmem:[%s256] sm:$0xff] 0.0
          %273 = vst [vmem:[%s256 + $0x8] sm:$0xff] 0.0
          %274 = vst [vmem:[%s256 + $0x10] sm:$0xff] 0.0
          %275 = vst [vmem:[%s256 + $0x18] sm:$0xff] 0.0
          %276 = vst [vmem:[%s256 + $0x20] sm:$0xff] 0.0
          %277 = vst [vmem:[%s256 + $0x28] sm:$0xff] 0.0
          %278 = vst [vmem:[%s256 + $0x30] sm:$0xff] 0.0
          %279 = vst [vmem:[%s256 + $0x38] sm:$0xff] 0.0
          %280 = vst [vmem:[%s256 + $0x40] sm:$0xff] 0.0
          %281 = vst [vmem:[%s256 + $0x48] sm:$0xff] 0.0
          %282 = vst [vmem:[%s256 + $0x50] sm:$0xff] 0.0
          %283 = vst [vmem:[%s256 + $0x58] sm:$0xff] 0.0
          %284 = vst [vmem:[%s256 + $0x60] sm:$0xff] 0.0
          %285 = vst [vmem:[%s256 + $0x68] sm:$0xff] 0.0
          %286 = vst [vmem:[%s256 + $0x70] sm:$0xff] 0.0
          %287 = vst [vmem:[%s256 + $0x78] sm:$0xff] 0.0
          %288 = vst [vmem:[%s256 + $0x80] sm:$0xff] 0.0
          %289 = vst [vmem:[%s256 + $0x88] sm:$0xff] 0.0
          %290 = vst [vmem:[%s256 + $0x90] sm:$0xff] 0.0
          %291 = vst [vmem:[%s256 + $0x98] sm:$0xff] 0.0
          %292 = vst [vmem:[%s256 + $0xa0] sm:$0xff] 0.0
          %293 = vst [vmem:[%s256 + $0xa8] sm:$0xff] 0.0
          %294 = vst [vmem:[%s256 + $0xb0] sm:$0xff] 0.0
          %295 = vst [vmem:[%s256 + $0xb8] sm:$0xff] 0.0
          %296 = vst [vmem:[%s256 + $0xc0] sm:$0xff] 0.0
          %297 = vst [vmem:[%s256 + $0xc8] sm:$0xff] 0.0
          %298 = vst [vmem:[%s256 + $0xd0] sm:$0xff] 0.0
          %299 = vst [vmem:[%s256 + $0xd8] sm:$0xff] 0.0
          %300 = vst [vmem:[%s256 + $0xe0] sm:$0xff] 0.0
          %301 = vst [vmem:[%s256 + $0xe8] sm:$0xff] 0.0
          %302 = vst [vmem:[%s256 + $0xf0] sm:$0xff] 0.0
          %303 = vst [vmem:[%s256 + $0xf8] sm:$0xff] 0.0
          %304 = vst [vmem:[%s256 + $0x100] sm:$0xff] 0.0
          %305 = vst [vmem:[%s256 + $0x108] sm:$0xff] 0.0
          %306 = vst [vmem:[%s256 + $0x110] sm:$0xff] 0.0
          %307 = vst [vmem:[%s256 + $0x118] sm:$0xff] 0.0
          %308 = vst [vmem:[%s256 + $0x120] sm:$0xff] 0.0
          %309 = vst [vmem:[%s256 + $0x128] sm:$0xff] 0.0
          %310 = vst [vmem:[%s256 + $0x130] sm:$0xff] 0.0
          %311 = vst [vmem:[%s256 + $0x138] sm:$0xff] 0.0
          %312 = vst [vmem:[%s256 + $0x140] sm:$0xff] 0.0
          %313 = vst [vmem:[%s256 + $0x148] sm:$0xff] 0.0
          %314 = vst [vmem:[%s256 + $0x150] sm:$0xff] 0.0
          %315 = vst [vmem:[%s256 + $0x158] sm:$0xff] 0.0
          %316 = vst [vmem:[%s256 + $0x160] sm:$0xff] 0.0
          %317 = vst [vmem:[%s256 + $0x168] sm:$0xff] 0.0
          %318 = vst [vmem:[%s256 + $0x170] sm:$0xff] 0.0
          %319 = vst [vmem:[%s256 + $0x178] sm:$0xff] 0.0
          %320 = vst [vmem:[%s256 + $0x180] sm:$0xff] 0.0
          %321 = vst [vmem:[%s256 + $0x188] sm:$0xff] 0.0
          %322 = vst [vmem:[%s256 + $0x190] sm:$0xff] 0.0
          %323 = vst [vmem:[%s256 + $0x198] sm:$0xff] 0.0
          %324 = vst [vmem:[%s256 + $0x1a0] sm:$0xff] 0.0
          %325 = vst [vmem:[%s256 + $0x1a8] sm:$0xff] 0.0
          %326 = vst [vmem:[%s256 + $0x1b0] sm:$0xff] 0.0
          %327 = vst [vmem:[%s256 + $0x1b8] sm:$0xff] 0.0
          %328 = vst [vmem:[%s256 + $0x1c0] sm:$0xff] 0.0
          %329 = vst [vmem:[%s256 + $0x1c8] sm:$0xff] 0.0
          %330 = vst [vmem:[%s256 + $0x1d0] sm:$0xff] 0.0
          %331 = vst [vmem:[%s256 + $0x1d8] sm:$0xff] 0.0
          %332 = vst [vmem:[%s256 + $0x1e0] sm:$0xff] 0.0
          %333 = vst [vmem:[%s256 + $0x1e8] sm:$0xff] 0.0
          %334 = vst [vmem:[%s256 + $0x1f0] sm:$0xff] 0.0
          %335 = vst [vmem:[%s256 + $0x1f8] sm:$0xff] 0.0
          %336 = vst [vmem:[%s256 + $0x200] sm:$0xff] 0.0
          %337 = vst [vmem:[%s256 + $0x208] sm:$0xff] 0.0
          %338 = vst [vmem:[%s256 + $0x210] sm:$0xff] 0.0
          %339 = vst [vmem:[%s256 + $0x218] sm:$0xff] 0.0
          %340 = vst [vmem:[%s256 + $0x220] sm:$0xff] 0.0
          %341 = vst [vmem:[%s256 + $0x228] sm:$0xff] 0.0
          %342 = vst [vmem:[%s256 + $0x230] sm:$0xff] 0.0
          %343 = vst [vmem:[%s256 + $0x238] sm:$0xff] 0.0
          %344 = vst [vmem:[%s256 + $0x240] sm:$0xff] 0.0
          %345 = vst [vmem:[%s256 + $0x248] sm:$0xff] 0.0
          %346 = vst [vmem:[%s256 + $0x250] sm:$0xff] 0.0
          %347 = vst [vmem:[%s256 + $0x258] sm:$0xff] 0.0
          %348 = vst [vmem:[%s256 + $0x260] sm:$0xff] 0.0
          %349 = vst [vmem:[%s256 + $0x268] sm:$0xff] 0.0
          %350 = vst [vmem:[%s256 + $0x270] sm:$0xff] 0.0
          %351 = vst [vmem:[%s256 + $0x278] sm:$0xff] 0.0
          %352 = vst [vmem:[%s256 + $0x280] sm:$0xff] 0.0
          %353 = vst [vmem:[%s256 + $0x288] sm:$0xff] 0.0
          %354 = vst [vmem:[%s256 + $0x290] sm:$0xff] 0.0
          %355 = vst [vmem:[%s256 + $0x298] sm:$0xff] 0.0
          %356 = vst [vmem:[%s256 + $0x2a0] sm:$0xff] 0.0
          %357 = vst [vmem:[%s256 + $0x2a8] sm:$0xff] 0.0
          %358 = vst [vmem:[%s256 + $0x2b0] sm:$0xff] 0.0
          %359 = vst [vmem:[%s256 + $0x2b8] sm:$0xff] 0.0
          %360 = vst [vmem:[%s256 + $0x2c0] sm:$0xff] 0.0
          %361 = vst [vmem:[%s256 + $0x2c8] sm:$0xff] 0.0
          %362 = vst [vmem:[%s256 + $0x2d0] sm:$0xff] 0.0
          %363 = vst [vmem:[%s256 + $0x2d8] sm:$0xff] 0.0
          %364 = vst [vmem:[%s256 + $0x2e0] sm:$0xff] 0.0
          %365 = vst [vmem:[%s256 + $0x2e8] sm:$0xff] 0.0
          %366 = vst [vmem:[%s256 + $0x2f0] sm:$0xff] 0.0
          %367 = vst [vmem:[%s256 + $0x2f8] sm:$0xff] 0.0
        $region44: #{tpu_custom_call.1} parent=31 // pred_fallthru
          _
        %v368 = vld [vmem:[%s256] sm:$0xff]
        %v369 = vld [vmem:[%s256 + $0x8] sm:$0xff]
        %v370 = vld [vmem:[%s256 + $0x10] sm:$0xff]
        %v371 = vld [vmem:[%s256 + $0x18] sm:$0xff]
        %v372 = vld [vmem:[%s256 + $0x20] sm:$0xff]
        %v373 = vld [vmem:[%s256 + $0x28] sm:$0xff]
        %v374 = vld [vmem:[%s256 + $0x30] sm:$0xff]
        %v375 = vld [vmem:[%s256 + $0x38] sm:$0xff]
        %v376 = vld [vmem:[%s256 + $0x40] sm:$0xff]
        %v377 = vld [vmem:[%s256 + $0x48] sm:$0xff]
        %v378 = vld [vmem:[%s256 + $0x50] sm:$0xff]
        %v379 = vld [vmem:[%s256 + $0x58] sm:$0xff]
        %v380 = vld [vmem:[%s256 + $0x60] sm:$0xff]
        %v381 = vld [vmem:[%s256 + $0x68] sm:$0xff]
        %v382 = vld [vmem:[%s256 + $0x70] sm:$0xff]
        %v383 = vld [vmem:[%s256 + $0x78] sm:$0xff]
        %v384 = vld [vmem:[%s256 + $0x80] sm:$0xff]
        %v385 = vld [vmem:[%s256 + $0x88] sm:$0xff]
        %v386 = vld [vmem:[%s256 + $0x90] sm:$0xff]
        %v387 = vld [vmem:[%s256 + $0x98] sm:$0xff]
        %v388 = vld [vmem:[%s256 + $0xa0] sm:$0xff]
        %v389 = vld [vmem:[%s256 + $0xa8] sm:$0xff]
        %v390 = vld [vmem:[%s256 + $0xb0] sm:$0xff]
        %v391 = vld [vmem:[%s256 + $0xb8] sm:$0xff]
        %v392 = vld [vmem:[%s256 + $0xc0] sm:$0xff]
        %v393 = vld [vmem:[%s256 + $0xc8] sm:$0xff]
        %v394 = vld [vmem:[%s256 + $0xd0] sm:$0xff]
        %v395 = vld [vmem:[%s256 + $0xd8] sm:$0xff]
        %v396 = vld [vmem:[%s256 + $0xe0] sm:$0xff]
        %v397 = vld [vmem:[%s256 + $0xe8] sm:$0xff]
        %v398 = vld [vmem:[%s256 + $0xf0] sm:$0xff]
        %v399 = vld [vmem:[%s256 + $0xf8] sm:$0xff]
        %v400 = vld [vmem:[%s256 + $0x100] sm:$0xff]
        %v401 = vld [vmem:[%s256 + $0x108] sm:$0xff]
        %v402 = vld [vmem:[%s256 + $0x110] sm:$0xff]
        %v403 = vld [vmem:[%s256 + $0x118] sm:$0xff]
        %v404 = vld [vmem:[%s256 + $0x120] sm:$0xff]
        %v405 = vld [vmem:[%s256 + $0x128] sm:$0xff]
        %v406 = vld [vmem:[%s256 + $0x130] sm:$0xff]
        %v407 = vld [vmem:[%s256 + $0x138] sm:$0xff]
        %v408 = vld [vmem:[%s256 + $0x140] sm:$0xff]
        %v409 = vld [vmem:[%s256 + $0x148] sm:$0xff]
        %v410 = vld [vmem:[%s256 + $0x150] sm:$0xff]
        %v411 = vld [vmem:[%s256 + $0x158] sm:$0xff]
        %v412 = vld [vmem:[%s256 + $0x160] sm:$0xff]
        %v413 = vld [vmem:[%s256 + $0x168] sm:$0xff]
        %v414 = vld [vmem:[%s256 + $0x170] sm:$0xff]
        %v415 = vld [vmem:[%s256 + $0x178] sm:$0xff]
        %v416 = vld [vmem:[%s256 + $0x180] sm:$0xff]
        %v417 = vld [vmem:[%s256 + $0x188] sm:$0xff]
        %v418 = vld [vmem:[%s256 + $0x190] sm:$0xff]
        %v419 = vld [vmem:[%s256 + $0x198] sm:$0xff]
        %v420 = vld [vmem:[%s256 + $0x1a0] sm:$0xff]
        %v421 = vld [vmem:[%s256 + $0x1a8] sm:$0xff]
        %v422 = vld [vmem:[%s256 + $0x1b0] sm:$0xff]
        %v423 = vld [vmem:[%s256 + $0x1b8] sm:$0xff]
        %v424 = vld [vmem:[%s256 + $0x1c0] sm:$0xff]
        %v425 = vld [vmem:[%s256 + $0x1c8] sm:$0xff]
        %v426 = vld [vmem:[%s256 + $0x1d0] sm:$0xff]
        %v427 = vld [vmem:[%s256 + $0x1d8] sm:$0xff]
        %v428 = vld [vmem:[%s256 + $0x1e0] sm:$0xff]
        %v429 = vld [vmem:[%s256 + $0x1e8] sm:$0xff]
        %v430 = vld [vmem:[%s256 + $0x1f0] sm:$0xff]
        %v431 = vld [vmem:[%s256 + $0x1f8] sm:$0xff]
        %v432 = vld [vmem:[%s256 + $0x200] sm:$0xff]
        %v433 = vld [vmem:[%s256 + $0x208] sm:$0xff]
        %v434 = vld [vmem:[%s256 + $0x210] sm:$0xff]
        %v435 = vld [vmem:[%s256 + $0x218] sm:$0xff]
        %v436 = vld [vmem:[%s256 + $0x220] sm:$0xff]
        %v437 = vld [vmem:[%s256 + $0x228] sm:$0xff]
        %v438 = vld [vmem:[%s256 + $0x230] sm:$0xff]
        %v439 = vld [vmem:[%s256 + $0x238] sm:$0xff]
        %v440 = vld [vmem:[%s256 + $0x240] sm:$0xff]
        %v441 = vld [vmem:[%s256 + $0x248] sm:$0xff]
        %v442 = vld [vmem:[%s256 + $0x250] sm:$0xff]
        %v443 = vld [vmem:[%s256 + $0x258] sm:$0xff]
        %v444 = vld [vmem:[%s256 + $0x260] sm:$0xff]
        %v445 = vld [vmem:[%s256 + $0x268] sm:$0xff]
        %v446 = vld [vmem:[%s256 + $0x270] sm:$0xff]
        %v447 = vld [vmem:[%s256 + $0x278] sm:$0xff]
        %v448 = vld [vmem:[%s256 + $0x280] sm:$0xff]
        %v449 = vld [vmem:[%s256 + $0x288] sm:$0xff]
        %v450 = vld [vmem:[%s256 + $0x290] sm:$0xff]
        %v451 = vld [vmem:[%s256 + $0x298] sm:$0xff]
        %v452 = vld [vmem:[%s256 + $0x2a0] sm:$0xff]
        %v453 = vld [vmem:[%s256 + $0x2a8] sm:$0xff]
        %v454 = vld [vmem:[%s256 + $0x2b0] sm:$0xff]
        %v455 = vld [vmem:[%s256 + $0x2b8] sm:$0xff]
        %v456 = vld [vmem:[%s256 + $0x2c0] sm:$0xff]
        %v457 = vld [vmem:[%s256 + $0x2c8] sm:$0xff]
        %v458 = vld [vmem:[%s256 + $0x2d0] sm:$0xff]
        %v459 = vld [vmem:[%s256 + $0x2d8] sm:$0xff]
        %v460 = vld [vmem:[%s256 + $0x2e0] sm:$0xff]
        %v461 = vld [vmem:[%s256 + $0x2e8] sm:$0xff]
        %v462 = vld [vmem:[%s256 + $0x2f0] sm:$0xff]
        %v463 = vld [vmem:[%s256 + $0x2f8] sm:$0xff]
        %v464 = vld [vmem:[#allocation2] sm:$0xff]
        %v465 = vld [vmem:[#allocation2 + $0x8] sm:$0xff]
        %v466 = vld [vmem:[#allocation2 + $0x10] sm:$0xff]
        %v467 = vld [vmem:[#allocation2 + $0x18] sm:$0xff]
        %v468 = vld [vmem:[#allocation2 + $0x20] sm:$0xff]
        %v469 = vld [vmem:[#allocation2 + $0x28] sm:$0xff]
        %v470 = vld [vmem:[#allocation2 + $0x30] sm:$0xff]
        %v471 = vld [vmem:[#allocation2 + $0x38] sm:$0xff]
        %v472 = vld [vmem:[#allocation2 + $0x40] sm:$0xff]
        %v473 = vld [vmem:[#allocation2 + $0x48] sm:$0xff]
        %v474 = vld [vmem:[#allocation2 + $0x50] sm:$0xff]
        %v475 = vld [vmem:[#allocation2 + $0x58] sm:$0xff]
        %v476 = vld [vmem:[#allocation2 + $0x60] sm:$0xff]
        %v477 = vld [vmem:[#allocation2 + $0x68] sm:$0xff]
        %v478 = vld [vmem:[#allocation2 + $0x70] sm:$0xff]
        %v479 = vld [vmem:[#allocation2 + $0x78] sm:$0xff]
        %v480 = vld [vmem:[#allocation2 + $0x80] sm:$0xff]
        %v481 = vld [vmem:[#allocation2 + $0x88] sm:$0xff]
        %v482 = vld [vmem:[#allocation2 + $0x90] sm:$0xff]
        %v483 = vld [vmem:[#allocation2 + $0x98] sm:$0xff]
        %v484 = vld [vmem:[#allocation2 + $0xa0] sm:$0xff]
        %v485 = vld [vmem:[#allocation2 + $0xa8] sm:$0xff]
        %v486 = vld [vmem:[#allocation2 + $0xb0] sm:$0xff]
        %v487 = vld [vmem:[#allocation2 + $0xb8] sm:$0xff]
        %v488 = vld [vmem:[#allocation2 + $0xc0] sm:$0xff]
        %v489 = vld [vmem:[#allocation2 + $0xc8] sm:$0xff]
        %v490 = vld [vmem:[#allocation2 + $0xd0] sm:$0xff]
        %v491 = vld [vmem:[#allocation2 + $0xd8] sm:$0xff]
        %v492 = vld [vmem:[#allocation2 + $0xe0] sm:$0xff]
        %v493 = vld [vmem:[#allocation2 + $0xe8] sm:$0xff]
        %v494 = vld [vmem:[#allocation2 + $0xf0] sm:$0xff]
        %v495 = vld [vmem:[#allocation2 + $0xf8] sm:$0xff]
        %v496 = vld [vmem:[#allocation2 + $0x100] sm:$0xff]
        %v497 = vld [vmem:[#allocation2 + $0x108] sm:$0xff]
        %v498 = vld [vmem:[#allocation2 + $0x110] sm:$0xff]
        %v499 = vld [vmem:[#allocation2 + $0x118] sm:$0xff]
        %v500 = vld [vmem:[#allocation2 + $0x120] sm:$0xff]
        %v501 = vld [vmem:[#allocation2 + $0x128] sm:$0xff]
        %v502 = vld [vmem:[#allocation2 + $0x130] sm:$0xff]
        %v503 = vld [vmem:[#allocation2 + $0x138] sm:$0xff]
        %v504 = vld [vmem:[#allocation2 + $0x140] sm:$0xff]
        %v505 = vld [vmem:[#allocation2 + $0x148] sm:$0xff]
        %v506 = vld [vmem:[#allocation2 + $0x150] sm:$0xff]
        %v507 = vld [vmem:[#allocation2 + $0x158] sm:$0xff]
        %v508 = vld [vmem:[#allocation2 + $0x160] sm:$0xff]
        %v509 = vld [vmem:[#allocation2 + $0x168] sm:$0xff]
        %v510 = vld [vmem:[#allocation2 + $0x170] sm:$0xff]
        %v511 = vld [vmem:[#allocation2 + $0x178] sm:$0xff]
        %v512 = vld [vmem:[#allocation2 + $0x180] sm:$0xff]
        %v513 = vld [vmem:[#allocation2 + $0x188] sm:$0xff]
        %v514 = vld [vmem:[#allocation2 + $0x190] sm:$0xff]
        %v515 = vld [vmem:[#allocation2 + $0x198] sm:$0xff]
        %v516 = vld [vmem:[#allocation2 + $0x1a0] sm:$0xff]
        %v517 = vld [vmem:[#allocation2 + $0x1a8] sm:$0xff]
        %v518 = vld [vmem:[#allocation2 + $0x1b0] sm:$0xff]
        %v519 = vld [vmem:[#allocation2 + $0x1b8] sm:$0xff]
        %v520 = vld [vmem:[#allocation2 + $0x1c0] sm:$0xff]
        %v521 = vld [vmem:[#allocation2 + $0x1c8] sm:$0xff]
        %v522 = vld [vmem:[#allocation2 + $0x1d0] sm:$0xff]
        %v523 = vld [vmem:[#allocation2 + $0x1d8] sm:$0xff]
        %v524 = vld [vmem:[#allocation2 + $0x1e0] sm:$0xff]
        %v525 = vld [vmem:[#allocation2 + $0x1e8] sm:$0xff]
        %v526 = vld [vmem:[#allocation2 + $0x1f0] sm:$0xff]
        %v527 = vld [vmem:[#allocation2 + $0x1f8] sm:$0xff]
        %v528 = vld [vmem:[%s230] sm:$0xff]
        %v529 = vld [vmem:[%s230 + $0x8] sm:$0xff]
        %v530 = vld [vmem:[%s230 + $0x10] sm:$0xff]
        %v531 = vld [vmem:[%s230 + $0x18] sm:$0xff]
        %v532 = vld [vmem:[%s230 + $0x20] sm:$0xff]
        %v533 = vld [vmem:[%s230 + $0x28] sm:$0xff]
        %v534 = vld [vmem:[%s230 + $0x30] sm:$0xff]
        %v535 = vld [vmem:[%s230 + $0x38] sm:$0xff]
        %v536 = vld [vmem:[%s230 + $0x40] sm:$0xff]
        %v537 = vld [vmem:[%s230 + $0x48] sm:$0xff]
        %v538 = vld [vmem:[%s230 + $0x50] sm:$0xff]
        %v539 = vld [vmem:[%s230 + $0x58] sm:$0xff]
        %v540 = vld [vmem:[%s230 + $0x60] sm:$0xff]
        %v541 = vld [vmem:[%s230 + $0x68] sm:$0xff]
        %v542 = vld [vmem:[%s230 + $0x70] sm:$0xff]
        %v543 = vld [vmem:[%s230 + $0x78] sm:$0xff]
        %v544 = vld [vmem:[%s230 + $0x80] sm:$0xff]
        %v545 = vld [vmem:[%s230 + $0x88] sm:$0xff]
        %v546 = vld [vmem:[%s230 + $0x90] sm:$0xff]
        %v547 = vld [vmem:[%s230 + $0x98] sm:$0xff]
        %v548 = vld [vmem:[%s230 + $0xa0] sm:$0xff]
        %v549 = vld [vmem:[%s230 + $0xa8] sm:$0xff]
        %v550 = vld [vmem:[%s230 + $0xb0] sm:$0xff]
        %v551 = vld [vmem:[%s230 + $0xb8] sm:$0xff]
        %v552 = vld [vmem:[%s230 + $0xc0] sm:$0xff]
        %v553 = vld [vmem:[%s230 + $0xc8] sm:$0xff]
        %v554 = vld [vmem:[%s230 + $0xd0] sm:$0xff]
        %v555 = vld [vmem:[%s230 + $0xd8] sm:$0xff]
        %v556 = vld [vmem:[%s230 + $0xe0] sm:$0xff]
        %v557 = vld [vmem:[%s230 + $0xe8] sm:$0xff]
        %v558 = vld [vmem:[%s230 + $0xf0] sm:$0xff]
        %v559 = vld [vmem:[%s230 + $0xf8] sm:$0xff]
        %v560 = vld [vmem:[%s230 + $0x100] sm:$0xff]
        %v561 = vld [vmem:[%s230 + $0x108] sm:$0xff]
        %v562 = vld [vmem:[%s230 + $0x110] sm:$0xff]
        %v563 = vld [vmem:[%s230 + $0x118] sm:$0xff]
        %v564 = vld [vmem:[%s230 + $0x120] sm:$0xff]
        %v565 = vld [vmem:[%s230 + $0x128] sm:$0xff]
        %v566 = vld [vmem:[%s230 + $0x130] sm:$0xff]
        %v567 = vld [vmem:[%s230 + $0x138] sm:$0xff]
        %v568 = vld [vmem:[%s230 + $0x140] sm:$0xff]
        %v569 = vld [vmem:[%s230 + $0x148] sm:$0xff]
        %v570 = vld [vmem:[%s230 + $0x150] sm:$0xff]
        %v571 = vld [vmem:[%s230 + $0x158] sm:$0xff]
        %v572 = vld [vmem:[%s230 + $0x160] sm:$0xff]
        %v573 = vld [vmem:[%s230 + $0x168] sm:$0xff]
        %v574 = vld [vmem:[%s230 + $0x170] sm:$0xff]
        %v575 = vld [vmem:[%s230 + $0x178] sm:$0xff]
        %v576 = vld [vmem:[%s230 + $0x180] sm:$0xff]
        %v577 = vld [vmem:[%s230 + $0x188] sm:$0xff]
        %v578 = vld [vmem:[%s230 + $0x190] sm:$0xff]
        %v579 = vld [vmem:[%s230 + $0x198] sm:$0xff]
        %v580 = vld [vmem:[%s230 + $0x1a0] sm:$0xff]
        %v581 = vld [vmem:[%s230 + $0x1a8] sm:$0xff]
        %v582 = vld [vmem:[%s230 + $0x1b0] sm:$0xff]
        %v583 = vld [vmem:[%s230 + $0x1b8] sm:$0xff]
        %v584 = vld [vmem:[%s230 + $0x1c0] sm:$0xff]
        %v585 = vld [vmem:[%s230 + $0x1c8] sm:$0xff]
        %v586 = vld [vmem:[%s230 + $0x1d0] sm:$0xff]
        %v587 = vld [vmem:[%s230 + $0x1d8] sm:$0xff]
        %v588 = vld [vmem:[%s230 + $0x1e0] sm:$0xff]
        %v589 = vld [vmem:[%s230 + $0x1e8] sm:$0xff]
        %v590 = vld [vmem:[%s230 + $0x1f0] sm:$0xff]
        %v591 = vld [vmem:[%s230 + $0x1f8] sm:$0xff]
        %v592 = vld [vmem:[%s230 + $0x200] sm:$0xff]
        %v593 = vld [vmem:[%s230 + $0x208] sm:$0xff]
        %v594 = vld [vmem:[%s230 + $0x210] sm:$0xff]
        %v595 = vld [vmem:[%s230 + $0x218] sm:$0xff]
        %v596 = vld [vmem:[%s230 + $0x220] sm:$0xff]
        %v597 = vld [vmem:[%s230 + $0x228] sm:$0xff]
        %v598 = vld [vmem:[%s230 + $0x230] sm:$0xff]
        %v599 = vld [vmem:[%s230 + $0x238] sm:$0xff]
        %v600 = vld [vmem:[%s230 + $0x240] sm:$0xff]
        %v601 = vld [vmem:[%s230 + $0x248] sm:$0xff]
        %v602 = vld [vmem:[%s230 + $0x250] sm:$0xff]
        %v603 = vld [vmem:[%s230 + $0x258] sm:$0xff]
        %v604 = vld [vmem:[%s230 + $0x260] sm:$0xff]
        %v605 = vld [vmem:[%s230 + $0x268] sm:$0xff]
        %v606 = vld [vmem:[%s230 + $0x270] sm:$0xff]
        %v607 = vld [vmem:[%s230 + $0x278] sm:$0xff]
        %v608 = vld [vmem:[%s230 + $0x280] sm:$0xff]
        %v609 = vld [vmem:[%s230 + $0x288] sm:$0xff]
        %v610 = vld [vmem:[%s230 + $0x290] sm:$0xff]
        %v611 = vld [vmem:[%s230 + $0x298] sm:$0xff]
        %v612 = vld [vmem:[%s230 + $0x2a0] sm:$0xff]
        %v613 = vld [vmem:[%s230 + $0x2a8] sm:$0xff]
        %v614 = vld [vmem:[%s230 + $0x2b0] sm:$0xff]
        %v615 = vld [vmem:[%s230 + $0x2b8] sm:$0xff]
        %v616 = vld [vmem:[%s230 + $0x2c0] sm:$0xff]
        %v617 = vld [vmem:[%s230 + $0x2c8] sm:$0xff]
        %v618 = vld [vmem:[%s230 + $0x2d0] sm:$0xff]
        %v619 = vld [vmem:[%s230 + $0x2d8] sm:$0xff]
        %v620 = vld [vmem:[%s230 + $0x2e0] sm:$0xff]
        %v621 = vld [vmem:[%s230 + $0x2e8] sm:$0xff]
        %v622 = vld [vmem:[%s230 + $0x2f0] sm:$0xff]
        %v623 = vld [vmem:[%s230 + $0x2f8] sm:$0xff]
        %624 = vmatprep.subr.mxu0 %v529
        %625 = vmatpush1.msra.mxu0 %v528
        %626 = vmatprep.subr.mxu0 %v532
        %627 = vmatpush1.msra.mxu0 %v531
        %628 = vmatprep.subr.mxu0 %v535
        %629 = vmatpush1.msra.mxu0 %v534
        %630 = vmatprep.subr.mxu0 %v538
        %631 = vmatpush1.msra.mxu0 %v537
        %632 = vmatprep.subr.mxu0 %v541
        %633 = vmatpush1.msra.mxu0 %v540
        %634 = vmatprep.subr.mxu0 %v544
        %635 = vmatpush1.msra.mxu0 %v543
        %636 = vmatprep.subr.mxu0 %v547
        %637 = vmatpush1.msra.mxu0 %v546
        %638 = vmatprep.subr.mxu0 %v550
        %639 = vmatpush1.msra.mxu0 %v549
        %640 = vmatprep.subr.mxu0 %v553
        %641 = vmatpush1.msra.mxu0 %v552
        %642 = vmatprep.subr.mxu0 %v556
        %643 = vmatpush1.msra.mxu0 %v555
        %644 = vmatprep.subr.mxu0 %v559
        %645 = vmatpush1.msra.mxu0 %v558
        %646 = vmatprep.subr.mxu0 %v562
        %647 = vmatpush1.msra.mxu0 %v561
        %648 = vmatprep.subr.mxu0 %v565
        %649 = vmatpush1.msra.mxu0 %v564
        %650 = vmatprep.subr.mxu0 %v568
        %651 = vmatpush1.msra.mxu0 %v567
        %652 = vmatprep.subr.mxu0 %v571
        %653 = vmatpush1.msra.mxu0 %v570
        %654 = vmatprep.subr.mxu0 %v574
        %655 = vmatpush1.msra.mxu0 %v573
        %656 = vmatprep.subr.mxu0 %v577
        %657 = vmatpush1.msra.mxu0 %v576
        %658 = vmatprep.subr.mxu0 %v580
        %659 = vmatpush1.msra.mxu0 %v579
        %660 = vmatprep.subr.mxu0 %v583
        %661 = vmatpush1.msra.mxu0 %v582
        %662 = vmatprep.subr.mxu0 %v586
        %663 = vmatpush1.msra.mxu0 %v585
        %664 = vmatprep.subr.mxu0 %v589
        %665 = vmatpush1.msra.mxu0 %v588
        %666 = vmatprep.subr.mxu0 %v592
        %667 = vmatpush1.msra.mxu0 %v591
        %668 = vmatprep.subr.mxu0 %v595
        %669 = vmatpush1.msra.mxu0 %v594
        %670 = vmatprep.subr.mxu0 %v598
        %671 = vmatpush1.msra.mxu0 %v597
        %672 = vmatprep.subr.mxu0 %v601
        %673 = vmatpush1.msra.mxu0 %v600
        %674 = vmatprep.subr.mxu0 %v604
        %675 = vmatpush1.msra.mxu0 %v603
        %676 = vmatprep.subr.mxu0 %v607
        %677 = vmatpush1.msra.mxu0 %v606
        %678 = vmatprep.subr.mxu0 %v610
        %679 = vmatpush1.msra.mxu0 %v609
        %680 = vmatprep.subr.mxu0 %v613
        %681 = vmatpush1.msra.mxu0 %v612
        %682 = vmatprep.subr.mxu0 %v616
        %683 = vmatpush1.msra.mxu0 %v615
        %684 = vmatprep.subr.mxu0 %v619
        %685 = vmatpush1.msra.mxu0 %v618
        %686 = vmatprep.subr.mxu0 %v622
        %687 = vmatpush1.msra.mxu0 %v621
        %688 = vmatprep.mubr.f32.mxu0 %v465
        %689 = vmatmul.mubr.f32.gmra.mrb[0].mxu0 %v464
        %v690 = vpop.f32.mrb[0].mxu0
        %v691 = vadd.f32 0.0, %v690
        %v692 = vpop.f32.mrb[0].mxu0
        %v693 = vadd.f32 0.0, %v692
        %694 = vmatprep.mubr.f32.mxu0 %v467
        %695 = vmatmul.mubr.f32.gmra.mrb[0].mxu0 %v466
        %v696 = vpop.f32.mrb[0].mxu0
        %v697 = vadd.f32 0.0, %v696
        %v698 = vpop.f32.mrb[0].mxu0
        %v699 = vadd.f32 0.0, %v698
        %700 = vmatprep.mubr.f32.mxu0 %v469
        %701 = vmatmul.mubr.f32.gmra.mrb[0].mxu0 %v468
        %v702 = vpop.f32.mrb[0].mxu0
        %v703 = vadd.f32 0.0, %v702
        %v704 = vpop.f32.mrb[0].mxu0
        %v705 = vadd.f32 0.0, %v704
        %706 = vmatprep.mubr.f32.mxu0 %v471
        %707 = vmatmul.mubr.f32.gmra.mrb[0].mxu0 %v470
        %v708 = vpop.f32.mrb[0].mxu0
        %v709 = vadd.f32 0.0, %v708
        %v710 = vpop.f32.mrb[0].mxu0
        %v711 = vadd.f32 0.0, %v710
        %712 = vmatprep.mubr.f32.mxu0 %v473
        %713 = vmatmul.mubr.f32.gmra.mrb[0].mxu0 %v472
        %v714 = vpop.f32.mrb[0].mxu0
        %v715 = vadd.f32 0.0, %v714
        %v716 = vpop.f32.mrb[0].mxu0
        %v717 = vadd.f32 0.0, %v716
        %718 = vmatprep.mubr.f32.mxu0 %v475
        %719 = vmatmul.mubr.f32.gmra.mrb[0].mxu0 %v474
        %v720 = vpop.f32.mrb[0].mxu0
        %v721 = vadd.f32 0.0, %v720
        %v722 = vpop.f32.mrb[0].mxu0
        %v723 = vadd.f32 0.0, %v722
        %724 = vmatprep.mubr.f32.mxu0 %v477
        %725 = vmatmul.mubr.f32.gmra.mrb[0].mxu0 %v476
        %v726 = vpop.f32.mrb[0].mxu0
        %v727 = vadd.f32 0.0, %v726
        %v728 = vpop.f32.mrb[0].mxu0
        %v729 = vadd.f32 0.0, %v728
        %730 = vmatprep.mubr.f32.mxu0 %v479
        %731 = vmatmul.mubr.f32.gmra.mrb[0].mxu0 %v478
        %v732 = vpop.f32.mrb[0].mxu0
        %v733 = vadd.f32 0.0, %v732
        %v734 = vpop.f32.mrb[0].mxu0
        %v735 = vadd.f32 0.0, %v734
        %736 = vmatprep.mubr.f32.mxu0 %v481
        %737 = vmatmul.mubr.f32.gmra.mrb[0].mxu0 %v480
        %v738 = vpop.f32.mrb[0].mxu0
        %v739 = vadd.f32 0.0, %v738
        %v740 = vpop.f32.mrb[0].mxu0
        %v741 = vadd.f32 0.0, %v740
        %742 = vmatprep.mubr.f32.mxu0 %v483
        %743 = vmatmul.mubr.f32.gmra.mrb[0].mxu0 %v482
        %v744 = vpop.f32.mrb[0].mxu0
        %v745 = vadd.f32 0.0, %v744
        %v746 = vpop.f32.mrb[0].mxu0
        %v747 = vadd.f32 0.0, %v746
        %748 = vmatprep.mubr.f32.mxu0 %v485
        %749 = vmatmul.mubr.f32.gmra.mrb[0].mxu0 %v484
        %v750 = vpop.f32.mrb[0].mxu0
        %v751 = vadd.f32 0.0, %v750
        %v752 = vpop.f32.mrb[0].mxu0
        %v753 = vadd.f32 0.0, %v752
        %754 = vmatprep.mubr.f32.mxu0 %v487
        %755 = vmatmul.mubr.f32.gmra.mrb[0].mxu0 %v486
        %v756 = vpop.f32.mrb[0].mxu0
        %v757 = vadd.f32 0.0, %v756
        %v758 = vpop.f32.mrb[0].mxu0
        %v759 = vadd.f32 0.0, %v758
        %760 = vmatprep.mubr.f32.mxu0 %v489
        %761 = vmatmul.mubr.f32.gmra.mrb[0].mxu0 %v488
        %v762 = vpop.f32.mrb[0].mxu0
        %v763 = vadd.f32 0.0, %v762
        %v764 = vpop.f32.mrb[0].mxu0
        %v765 = vadd.f32 0.0, %v764
        %766 = vmatprep.mubr.f32.mxu0 %v491
        %767 = vmatmul.mubr.f32.gmra.mrb[0].mxu0 %v490
        %v768 = vpop.f32.mrb[0].mxu0
        %v769 = vadd.f32 0.0, %v768
        %v770 = vpop.f32.mrb[0].mxu0
        %v771 = vadd.f32 0.0, %v770
        %772 = vmatprep.mubr.f32.mxu0 %v493
        %773 = vmatmul.mubr.f32.gmra.mrb[0].mxu0 %v492
        %v774 = vpop.f32.mrb[0].mxu0
        %v775 = vadd.f32 0.0, %v774
        %v776 = vpop.f32.mrb[0].mxu0
        %v777 = vadd.f32 0.0, %v776
        %778 = vmatprep.mubr.f32.mxu0 %v495
        %779 = vmatmul.mubr.f32.gmra.mrb[0].mxu0 %v494
        %v780 = vpop.f32.mrb[0].mxu0
        %v781 = vadd.f32 0.0, %v780
        %v782 = vpop.f32.mrb[0].mxu0
        %v783 = vadd.f32 0.0, %v782
        %784 = vmatprep.mubr.f32.mxu0 %v497
        %785 = vmatmul.mubr.f32.gmra.mrb[0].mxu0 %v496
        %v786 = vpop.f32.mrb[0].mxu0
        %v787 = vadd.f32 0.0, %v786
        %v788 = vpop.f32.mrb[0].mxu0
        %v789 = vadd.f32 0.0, %v788
        %790 = vmatprep.mubr.f32.mxu0 %v499
        %791 = vmatmul.mubr.f32.gmra.mrb[0].mxu0 %v498
        %v792 = vpop.f32.mrb[0].mxu0
        %v793 = vadd.f32 0.0, %v792
        %v794 = vpop.f32.mrb[0].mxu0
        %v795 = vadd.f32 0.0, %v794
        %796 = vmatprep.mubr.f32.mxu0 %v501
        %797 = vmatmul.mubr.f32.gmra.mrb[0].mxu0 %v500
        %v798 = vpop.f32.mrb[0].mxu0
        %v799 = vadd.f32 0.0, %v798
        %v800 = vpop.f32.mrb[0].mxu0
        %v801 = vadd.f32 0.0, %v800
        %802 = vmatprep.mubr.f32.mxu0 %v503
        %803 = vmatmul.mubr.f32.gmra.mrb[0].mxu0 %v502
        %v804 = vpop.f32.mrb[0].mxu0
        %v805 = vadd.f32 0.0, %v804
        %v806 = vpop.f32.mrb[0].mxu0
        %v807 = vadd.f32 0.0, %v806
        %808 = vmatprep.mubr.f32.mxu0 %v505
        %809 = vmatmul.mubr.f32.gmra.mrb[0].mxu0 %v504
        %v810 = vpop.f32.mrb[0].mxu0
        %v811 = vadd.f32 0.0, %v810
        %v812 = vpop.f32.mrb[0].mxu0
        %v813 = vadd.f32 0.0, %v812
        %814 = vmatprep.mubr.f32.mxu0 %v507
        %815 = vmatmul.mubr.f32.gmra.mrb[0].mxu0 %v506
        %v816 = vpop.f32.mrb[0].mxu0
        %v817 = vadd.f32 0.0, %v816
        %v818 = vpop.f32.mrb[0].mxu0
        %v819 = vadd.f32 0.0, %v818
        %820 = vmatprep.mubr.f32.mxu0 %v509
        %821 = vmatmul.mubr.f32.gmra.mrb[0].mxu0 %v508
        %v822 = vpop.f32.mrb[0].mxu0
        %v823 = vadd.f32 0.0, %v822
        %v824 = vpop.f32.mrb[0].mxu0
        %v825 = vadd.f32 0.0, %v824
        %826 = vmatprep.mubr.f32.mxu0 %v511
        %827 = vmatmul.mubr.f32.gmra.mrb[0].mxu0 %v510
        %v828 = vpop.f32.mrb[0].mxu0
        %v829 = vadd.f32 0.0, %v828
        %v830 = vpop.f32.mrb[0].mxu0
        %v831 = vadd.f32 0.0, %v830
        %832 = vmatprep.mubr.f32.mxu0 %v513
        %833 = vmatmul.mubr.f32.gmra.mrb[0].mxu0 %v512
        %v834 = vpop.f32.mrb[0].mxu0
        %v835 = vadd.f32 0.0, %v834
        %v836 = vpop.f32.mrb[0].mxu0
        %v837 = vadd.f32 0.0, %v836
        %838 = vmatprep.mubr.f32.mxu0 %v515
        %839 = vmatmul.mubr.f32.gmra.mrb[0].mxu0 %v514
        %v840 = vpop.f32.mrb[0].mxu0
        %v841 = vadd.f32 0.0, %v840
        %v842 = vpop.f32.mrb[0].mxu0
        %v843 = vadd.f32 0.0, %v842
        %844 = vmatprep.mubr.f32.mxu0 %v517
        %845 = vmatmul.mubr.f32.gmra.mrb[0].mxu0 %v516
        %v846 = vpop.f32.mrb[0].mxu0
        %v847 = vadd.f32 0.0, %v846
        %v848 = vpop.f32.mrb[0].mxu0
        %v849 = vadd.f32 0.0, %v848
        %850 = vmatprep.mubr.f32.mxu0 %v519
        %851 = vmatmul.mubr.f32.gmra.mrb[0].mxu0 %v518
        %v852 = vpop.f32.mrb[0].mxu0
        %v853 = vadd.f32 0.0, %v852
        %v854 = vpop.f32.mrb[0].mxu0
        %v855 = vadd.f32 0.0, %v854
        %856 = vmatprep.mubr.f32.mxu0 %v521
        %857 = vmatmul.mubr.f32.gmra.mrb[0].mxu0 %v520
        %v858 = vpop.f32.mrb[0].mxu0
        %v859 = vadd.f32 0.0, %v858
        %v860 = vpop.f32.mrb[0].mxu0
        %v861 = vadd.f32 0.0, %v860
        %862 = vmatprep.mubr.f32.mxu0 %v523
        %863 = vmatmul.mubr.f32.gmra.mrb[0].mxu0 %v522
        %v864 = vpop.f32.mrb[0].mxu0
        %v865 = vadd.f32 0.0, %v864
        %v866 = vpop.f32.mrb[0].mxu0
        %v867 = vadd.f32 0.0, %v866
        %868 = vmatprep.mubr.f32.mxu0 %v525
        %869 = vmatmul.mubr.f32.gmra.mrb[0].mxu0 %v524
        %v870 = vpop.f32.mrb[0].mxu0
        %v871 = vadd.f32 0.0, %v870
        %v872 = vpop.f32.mrb[0].mxu0
        %v873 = vadd.f32 0.0, %v872
        %874 = vmatprep.mubr.f32.mxu0 %v527
        %875 = vmatmul.mubr.f32.gmra.mrb[0].mxu0 %v526
        %v876 = vpop.f32.mrb[0].mxu0
        %v877 = vadd.f32 0.0, %v876
        %v878 = vpop.f32.mrb[0].mxu0
        %v879 = vadd.f32 0.0, %v878
        %880 = vdwg.mxu0
        %881 = vmatprep.subr.mxu0 0.0
        %882 = vmatpush1.msra.mxu0 %v530
        %883 = vmatprep.subr.mxu0 0.0
        %884 = vmatpush1.msra.mxu0 %v533
        %885 = vmatprep.subr.mxu0 0.0
        %886 = vmatpush1.msra.mxu0 %v536
        %887 = vmatprep.subr.mxu0 0.0
        %888 = vmatpush1.msra.mxu0 %v539
        %889 = vmatprep.subr.mxu0 0.0
        %890 = vmatpush1.msra.mxu0 %v542
        %891 = vmatprep.subr.mxu0 0.0
        %892 = vmatpush1.msra.mxu0 %v545
        %893 = vmatprep.subr.mxu0 0.0
        %894 = vmatpush1.msra.mxu0 %v548
        %895 = vmatprep.subr.mxu0 0.0
        %896 = vmatpush1.msra.mxu0 %v551
        %897 = vmatprep.subr.mxu0 0.0
        %898 = vmatpush1.msra.mxu0 %v554
        %899 = vmatprep.subr.mxu0 0.0
        %900 = vmatpush1.msra.mxu0 %v557
        %901 = vmatprep.subr.mxu0 0.0
        %902 = vmatpush1.msra.mxu0 %v560
        %903 = vmatprep.subr.mxu0 0.0
        %904 = vmatpush1.msra.mxu0 %v563
        %905 = vmatprep.subr.mxu0 0.0
        %906 = vmatpush1.msra.mxu0 %v566
        %907 = vmatprep.subr.mxu0 0.0
        %908 = vmatpush1.msra.mxu0 %v569
        %909 = vmatprep.subr.mxu0 0.0
        %910 = vmatpush1.msra.mxu0 %v572
        %911 = vmatprep.subr.mxu0 0.0
        %912 = vmatpush1.msra.mxu0 %v575
        %913 = vmatprep.subr.mxu0 0.0
        %914 = vmatpush1.msra.mxu0 %v578
        %915 = vmatprep.subr.mxu0 0.0
        %916 = vmatpush1.msra.mxu0 %v581
        %917 = vmatprep.subr.mxu0 0.0
        %918 = vmatpush1.msra.mxu0 %v584
        %919 = vmatprep.subr.mxu0 0.0
        %920 = vmatpush1.msra.mxu0 %v587
        %921 = vmatprep.subr.mxu0 0.0
        %922 = vmatpush1.msra.mxu0 %v590
        %923 = vmatprep.subr.mxu0 0.0
        %924 = vmatpush1.msra.mxu0 %v593
        %925 = vmatprep.subr.mxu0 0.0
        %926 = vmatpush1.msra.mxu0 %v596
        %927 = vmatprep.subr.mxu0 0.0
        %928 = vmatpush1.msra.mxu0 %v599
        %929 = vmatprep.subr.mxu0 0.0
        %930 = vmatpush1.msra.mxu0 %v602
        %931 = vmatprep.subr.mxu0 0.0
        %932 = vmatpush1.msra.mxu0 %v605
        %933 = vmatprep.subr.mxu0 0.0
        %934 = vmatpush1.msra.mxu0 %v608
        %935 = vmatprep.subr.mxu0 0.0
        %936 = vmatpush1.msra.mxu0 %v611
        %937 = vmatprep.subr.mxu0 0.0
        %938 = vmatpush1.msra.mxu0 %v614
        %939 = vmatprep.subr.mxu0 0.0
        %940 = vmatpush1.msra.mxu0 %v617
        %941 = vmatprep.subr.mxu0 0.0
        %942 = vmatpush1.msra.mxu0 %v620
        %943 = vmatprep.subr.mxu0 0.0
        %944 = vmatpush1.msra.mxu0 %v623
        %945 = vmatprep.mubr.f32.mxu0 %v465
        %946 = vmatmul.mubr.f32.gmra.mrb[0].mxu0 %v464
        %v947 = vpop.f32.mrb[0].mxu0
        %v948 = vadd.f32 0.0, %v947
        %v949 = vpop.f32.mrb[0].mxu0
        %950 = vmatprep.mubr.f32.mxu0 %v467
        %951 = vmatmul.mubr.f32.gmra.mrb[0].mxu0 %v466
        %v952 = vpop.f32.mrb[0].mxu0
        %v953 = vadd.f32 0.0, %v952
        %v954 = vpop.f32.mrb[0].mxu0
        %955 = vmatprep.mubr.f32.mxu0 %v469
        %956 = vmatmul.mubr.f32.gmra.mrb[0].mxu0 %v468
        %v957 = vpop.f32.mrb[0].mxu0
        %v958 = vadd.f32 0.0, %v957
        %v959 = vpop.f32.mrb[0].mxu0
        %960 = vmatprep.mubr.f32.mxu0 %v471
        %961 = vmatmul.mubr.f32.gmra.mrb[0].mxu0 %v470
        %v962 = vpop.f32.mrb[0].mxu0
        %v963 = vadd.f32 0.0, %v962
        %v964 = vpop.f32.mrb[0].mxu0
        %965 = vmatprep.mubr.f32.mxu0 %v473
        %966 = vmatmul.mubr.f32.gmra.mrb[0].mxu0 %v472
        %v967 = vpop.f32.mrb[0].mxu0
        %v968 = vadd.f32 0.0, %v967
        %v969 = vpop.f32.mrb[0].mxu0
        %970 = vmatprep.mubr.f32.mxu0 %v475
        %971 = vmatmul.mubr.f32.gmra.mrb[0].mxu0 %v474
        %v972 = vpop.f32.mrb[0].mxu0
        %v973 = vadd.f32 0.0, %v972
        %v974 = vpop.f32.mrb[0].mxu0
        %975 = vmatprep.mubr.f32.mxu0 %v477
        %976 = vmatmul.mubr.f32.gmra.mrb[0].mxu0 %v476
        %v977 = vpop.f32.mrb[0].mxu0
        %v978 = vadd.f32 0.0, %v977
        %v979 = vpop.f32.mrb[0].mxu0
        %980 = vmatprep.mubr.f32.mxu0 %v479
        %981 = vmatmul.mubr.f32.gmra.mrb[0].mxu0 %v478
        %v982 = vpop.f32.mrb[0].mxu0
        %v983 = vadd.f32 0.0, %v982
        %v984 = vpop.f32.mrb[0].mxu0
        %985 = vmatprep.mubr.f32.mxu0 %v481
        %986 = vmatmul.mubr.f32.gmra.mrb[0].mxu0 %v480
        %v987 = vpop.f32.mrb[0].mxu0
        %v988 = vadd.f32 0.0, %v987
        %v989 = vpop.f32.mrb[0].mxu0
        %990 = vmatprep.mubr.f32.mxu0 %v483
        %991 = vmatmul.mubr.f32.gmra.mrb[0].mxu0 %v482
        %v992 = vpop.f32.mrb[0].mxu0
        %v993 = vadd.f32 0.0, %v992
        %v994 = vpop.f32.mrb[0].mxu0
        %995 = vmatprep.mubr.f32.mxu0 %v485
        %996 = vmatmul.mubr.f32.gmra.mrb[0].mxu0 %v484
        %v997 = vpop.f32.mrb[0].mxu0
        %v998 = vadd.f32 0.0, %v997
        %v999 = vpop.f32.mrb[0].mxu0
        %1000 = vmatprep.mubr.f32.mxu0 %v487
        %1001 = vmatmul.mubr.f32.gmra.mrb[0].mxu0 %v486
        %v1002 = vpop.f32.mrb[0].mxu0
        %v1003 = vadd.f32 0.0, %v1002
        %v1004 = vpop.f32.mrb[0].mxu0
        %1005 = vmatprep.mubr.f32.mxu0 %v489
        %1006 = vmatmul.mubr.f32.gmra.mrb[0].mxu0 %v488
        %v1007 = vpop.f32.mrb[0].mxu0
        %v1008 = vadd.f32 0.0, %v1007
        %v1009 = vpop.f32.mrb[0].mxu0
        %1010 = vmatprep.mubr.f32.mxu0 %v491
        %1011 = vmatmul.mubr.f32.gmra.mrb[0].mxu0 %v490
        %v1012 = vpop.f32.mrb[0].mxu0
        %v1013 = vadd.f32 0.0, %v1012
        %v1014 = vpop.f32.mrb[0].mxu0
        %1015 = vmatprep.mubr.f32.mxu0 %v493
        %1016 = vmatmul.mubr.f32.gmra.mrb[0].mxu0 %v492
        %v1017 = vpop.f32.mrb[0].mxu0
        %v1018 = vadd.f32 0.0, %v1017
        %v1019 = vpop.f32.mrb[0].mxu0
        %1020 = vmatprep.mubr.f32.mxu0 %v495
        %1021 = vmatmul.mubr.f32.gmra.mrb[0].mxu0 %v494
        %v1022 = vpop.f32.mrb[0].mxu0
        %v1023 = vadd.f32 0.0, %v1022
        %v1024 = vpop.f32.mrb[0].mxu0
        %1025 = vmatprep.mubr.f32.mxu0 %v497
        %1026 = vmatmul.mubr.f32.gmra.mrb[0].mxu0 %v496
        %v1027 = vpop.f32.mrb[0].mxu0
        %v1028 = vadd.f32 0.0, %v1027
        %v1029 = vpop.f32.mrb[0].mxu0
        %1030 = vmatprep.mubr.f32.mxu0 %v499
        %1031 = vmatmul.mubr.f32.gmra.mrb[0].mxu0 %v498
        %v1032 = vpop.f32.mrb[0].mxu0
        %v1033 = vadd.f32 0.0, %v1032
        %v1034 = vpop.f32.mrb[0].mxu0
        %1035 = vmatprep.mubr.f32.mxu0 %v501
        %1036 = vmatmul.mubr.f32.gmra.mrb[0].mxu0 %v500
        %v1037 = vpop.f32.mrb[0].mxu0
        %v1038 = vadd.f32 0.0, %v1037
        %v1039 = vpop.f32.mrb[0].mxu0
        %1040 = vmatprep.mubr.f32.mxu0 %v503
        %1041 = vmatmul.mubr.f32.gmra.mrb[0].mxu0 %v502
        %v1042 = vpop.f32.mrb[0].mxu0
        %v1043 = vadd.f32 0.0, %v1042
        %v1044 = vpop.f32.mrb[0].mxu0
        %1045 = vmatprep.mubr.f32.mxu0 %v505
        %1046 = vmatmul.mubr.f32.gmra.mrb[0].mxu0 %v504
        %v1047 = vpop.f32.mrb[0].mxu0
        %v1048 = vadd.f32 0.0, %v1047
        %v1049 = vpop.f32.mrb[0].mxu0
        %1050 = vmatprep.mubr.f32.mxu0 %v507
        %1051 = vmatmul.mubr.f32.gmra.mrb[0].mxu0 %v506
        %v1052 = vpop.f32.mrb[0].mxu0
        %v1053 = vadd.f32 0.0, %v1052
        %v1054 = vpop.f32.mrb[0].mxu0
        %1055 = vmatprep.mubr.f32.mxu0 %v509
        %1056 = vmatmul.mubr.f32.gmra.mrb[0].mxu0 %v508
        %v1057 = vpop.f32.mrb[0].mxu0
        %v1058 = vadd.f32 0.0, %v1057
        %v1059 = vpop.f32.mrb[0].mxu0
        %1060 = vmatprep.mubr.f32.mxu0 %v511
        %1061 = vmatmul.mubr.f32.gmra.mrb[0].mxu0 %v510
        %v1062 = vpop.f32.mrb[0].mxu0
        %v1063 = vadd.f32 0.0, %v1062
        %v1064 = vpop.f32.mrb[0].mxu0
        %1065 = vmatprep.mubr.f32.mxu0 %v513
        %1066 = vmatmul.mubr.f32.gmra.mrb[0].mxu0 %v512
        %v1067 = vpop.f32.mrb[0].mxu0
        %v1068 = vadd.f32 0.0, %v1067
        %v1069 = vpop.f32.mrb[0].mxu0
        %1070 = vmatprep.mubr.f32.mxu0 %v515
        %1071 = vmatmul.mubr.f32.gmra.mrb[0].mxu0 %v514
        %v1072 = vpop.f32.mrb[0].mxu0
        %v1073 = vadd.f32 0.0, %v1072
        %v1074 = vpop.f32.mrb[0].mxu0
        %1075 = vmatprep.mubr.f32.mxu0 %v517
        %1076 = vmatmul.mubr.f32.gmra.mrb[0].mxu0 %v516
        %v1077 = vpop.f32.mrb[0].mxu0
        %v1078 = vadd.f32 0.0, %v1077
        %v1079 = vpop.f32.mrb[0].mxu0
        %1080 = vmatprep.mubr.f32.mxu0 %v519
        %1081 = vmatmul.mubr.f32.gmra.mrb[0].mxu0 %v518
        %v1082 = vpop.f32.mrb[0].mxu0
        %v1083 = vadd.f32 0.0, %v1082
        %v1084 = vpop.f32.mrb[0].mxu0
        %1085 = vmatprep.mubr.f32.mxu0 %v521
        %1086 = vmatmul.mubr.f32.gmra.mrb[0].mxu0 %v520
        %v1087 = vpop.f32.mrb[0].mxu0
        %v1088 = vadd.f32 0.0, %v1087
        %v1089 = vpop.f32.mrb[0].mxu0
        %1090 = vmatprep.mubr.f32.mxu0 %v523
        %1091 = vmatmul.mubr.f32.gmra.mrb[0].mxu0 %v522
        %v1092 = vpop.f32.mrb[0].mxu0
        %v1093 = vadd.f32 0.0, %v1092
        %v1094 = vpop.f32.mrb[0].mxu0
        %1095 = vmatprep.mubr.f32.mxu0 %v525
        %1096 = vmatmul.mubr.f32.gmra.mrb[0].mxu0 %v524
        %v1097 = vpop.f32.mrb[0].mxu0
        %v1098 = vadd.f32 0.0, %v1097
        %v1099 = vpop.f32.mrb[0].mxu0
        %1100 = vmatprep.mubr.f32.mxu0 %v527
        %1101 = vmatmul.mubr.f32.gmra.mrb[0].mxu0 %v526
        %v1102 = vpop.f32.mrb[0].mxu0
        %v1103 = vadd.f32 0.0, %v1102
        %v1104 = vpop.f32.mrb[0].mxu0
        %1105 = vdwg.mxu0
        %v1106 = vadd.f32 %v368, %v691
        %v1107 = vadd.f32 %v369, %v693
        %v1108 = vadd.f32 %v370, %v948
        %v1109 = vadd.f32 %v371, %v697
        %v1110 = vadd.f32 %v372, %v699
        %v1111 = vadd.f32 %v373, %v953
        %v1112 = vadd.f32 %v374, %v703
        %v1113 = vadd.f32 %v375, %v705
        %v1114 = vadd.f32 %v376, %v958
        %v1115 = vadd.f32 %v377, %v709
        %v1116 = vadd.f32 %v378, %v711
        %v1117 = vadd.f32 %v379, %v963
        %v1118 = vadd.f32 %v380, %v715
        %v1119 = vadd.f32 %v381, %v717
        %v1120 = vadd.f32 %v382, %v968
        %v1121 = vadd.f32 %v383, %v721
        %v1122 = vadd.f32 %v384, %v723
        %v1123 = vadd.f32 %v385, %v973
        %v1124 = vadd.f32 %v386, %v727
        %v1125 = vadd.f32 %v387, %v729
        %v1126 = vadd.f32 %v388, %v978
        %v1127 = vadd.f32 %v389, %v733
        %v1128 = vadd.f32 %v390, %v735
        %v1129 = vadd.f32 %v391, %v983
        %v1130 = vadd.f32 %v392, %v739
        %v1131 = vadd.f32 %v393, %v741
        %v1132 = vadd.f32 %v394, %v988
        %v1133 = vadd.f32 %v395, %v745
        %v1134 = vadd.f32 %v396, %v747
        %v1135 = vadd.f32 %v397, %v993
        %v1136 = vadd.f32 %v398, %v751
        %v1137 = vadd.f32 %v399, %v753
        %v1138 = vadd.f32 %v400, %v998
        %v1139 = vadd.f32 %v401, %v757
        %v1140 = vadd.f32 %v402, %v759
        %v1141 = vadd.f32 %v403, %v1003
        %v1142 = vadd.f32 %v404, %v763
        %v1143 = vadd.f32 %v405, %v765
        %v1144 = vadd.f32 %v406, %v1008
        %v1145 = vadd.f32 %v407, %v769
        %v1146 = vadd.f32 %v408, %v771
        %v1147 = vadd.f32 %v409, %v1013
        %v1148 = vadd.f32 %v410, %v775
        %v1149 = vadd.f32 %v411, %v777
        %v1150 = vadd.f32 %v412, %v1018
        %v1151 = vadd.f32 %v413, %v781
        %v1152 = vadd.f32 %v414, %v783
        %v1153 = vadd.f32 %v415, %v1023
        %v1154 = vadd.f32 %v416, %v787
        %v1155 = vadd.f32 %v417, %v789
        %v1156 = vadd.f32 %v418, %v1028
        %v1157 = vadd.f32 %v419, %v793
        %v1158 = vadd.f32 %v420, %v795
        %v1159 = vadd.f32 %v421, %v1033
        %v1160 = vadd.f32 %v422, %v799
        %v1161 = vadd.f32 %v423, %v801
        %v1162 = vadd.f32 %v424, %v1038
        %v1163 = vadd.f32 %v425, %v805
        %v1164 = vadd.f32 %v426, %v807
        %v1165 = vadd.f32 %v427, %v1043
        %v1166 = vadd.f32 %v428, %v811
        %v1167 = vadd.f32 %v429, %v813
        %v1168 = vadd.f32 %v430, %v1048
        %v1169 = vadd.f32 %v431, %v817
        %v1170 = vadd.f32 %v432, %v819
        %v1171 = vadd.f32 %v433, %v1053
        %v1172 = vadd.f32 %v434, %v823
        %v1173 = vadd.f32 %v435, %v825
        %v1174 = vadd.f32 %v436, %v1058
        %v1175 = vadd.f32 %v437, %v829
        %v1176 = vadd.f32 %v438, %v831
        %v1177 = vadd.f32 %v439, %v1063
        %v1178 = vadd.f32 %v440, %v835
        %v1179 = vadd.f32 %v441, %v837
        %v1180 = vadd.f32 %v442, %v1068
        %v1181 = vadd.f32 %v443, %v841
        %v1182 = vadd.f32 %v444, %v843
        %v1183 = vadd.f32 %v445, %v1073
        %v1184 = vadd.f32 %v446, %v847
        %v1185 = vadd.f32 %v447, %v849
        %v1186 = vadd.f32 %v448, %v1078
        %v1187 = vadd.f32 %v449, %v853
        %v1188 = vadd.f32 %v450, %v855
        %v1189 = vadd.f32 %v451, %v1083
        %v1190 = vadd.f32 %v452, %v859
        %v1191 = vadd.f32 %v453, %v861
        %v1192 = vadd.f32 %v454, %v1088
        %v1193 = vadd.f32 %v455, %v865
        %v1194 = vadd.f32 %v456, %v867
        %v1195 = vadd.f32 %v457, %v1093
        %v1196 = vadd.f32 %v458, %v871
        %v1197 = vadd.f32 %v459, %v873
        %v1198 = vadd.f32 %v460, %v1098
        %v1199 = vadd.f32 %v461, %v877
        %v1200 = vadd.f32 %v462, %v879
        %v1201 = vadd.f32 %v463, %v1103
        %1202 = vst [vmem:[%s256] sm:$0xff] %v1106
        %1203 = vst [vmem:[%s256 + $0x8] sm:$0xff] %v1107
        %1204 = vst [vmem:[%s256 + $0x10] sm:$0xff] %v1108
        %1205 = vst [vmem:[%s256 + $0x18] sm:$0xff] %v1109
        %1206 = vst [vmem:[%s256 + $0x20] sm:$0xff] %v1110
        %1207 = vst [vmem:[%s256 + $0x28] sm:$0xff] %v1111
        %1208 = vst [vmem:[%s256 + $0x30] sm:$0xff] %v1112
        %1209 = vst [vmem:[%s256 + $0x38] sm:$0xff] %v1113
        %1210 = vst [vmem:[%s256 + $0x40] sm:$0xff] %v1114
        %1211 = vst [vmem:[%s256 + $0x48] sm:$0xff] %v1115
        %1212 = vst [vmem:[%s256 + $0x50] sm:$0xff] %v1116
        %1213 = vst [vmem:[%s256 + $0x58] sm:$0xff] %v1117
        %1214 = vst [vmem:[%s256 + $0x60] sm:$0xff] %v1118
        %1215 = vst [vmem:[%s256 + $0x68] sm:$0xff] %v1119
        %1216 = vst [vmem:[%s256 + $0x70] sm:$0xff] %v1120
        %1217 = vst [vmem:[%s256 + $0x78] sm:$0xff] %v1121
        %1218 = vst [vmem:[%s256 + $0x80] sm:$0xff] %v1122
        %1219 = vst [vmem:[%s256 + $0x88] sm:$0xff] %v1123
        %1220 = vst [vmem:[%s256 + $0x90] sm:$0xff] %v1124
        %1221 = vst [vmem:[%s256 + $0x98] sm:$0xff] %v1125
        %1222 = vst [vmem:[%s256 + $0xa0] sm:$0xff] %v1126
        %1223 = vst [vmem:[%s256 + $0xa8] sm:$0xff] %v1127
        %1224 = vst [vmem:[%s256 + $0xb0] sm:$0xff] %v1128
        %1225 = vst [vmem:[%s256 + $0xb8] sm:$0xff] %v1129
        %1226 = vst [vmem:[%s256 + $0xc0] sm:$0xff] %v1130
        %1227 = vst [vmem:[%s256 + $0xc8] sm:$0xff] %v1131
        %1228 = vst [vmem:[%s256 + $0xd0] sm:$0xff] %v1132
        %1229 = vst [vmem:[%s256 + $0xd8] sm:$0xff] %v1133
        %1230 = vst [vmem:[%s256 + $0xe0] sm:$0xff] %v1134
        %1231 = vst [vmem:[%s256 + $0xe8] sm:$0xff] %v1135
        %1232 = vst [vmem:[%s256 + $0xf0] sm:$0xff] %v1136
        %1233 = vst [vmem:[%s256 + $0xf8] sm:$0xff] %v1137
        %1234 = vst [vmem:[%s256 + $0x100] sm:$0xff] %v1138
        %1235 = vst [vmem:[%s256 + $0x108] sm:$0xff] %v1139
        %1236 = vst [vmem:[%s256 + $0x110] sm:$0xff] %v1140
        %1237 = vst [vmem:[%s256 + $0x118] sm:$0xff] %v1141
        %1238 = vst [vmem:[%s256 + $0x120] sm:$0xff] %v1142
        %1239 = vst [vmem:[%s256 + $0x128] sm:$0xff] %v1143
        %1240 = vst [vmem:[%s256 + $0x130] sm:$0xff] %v1144
        %1241 = vst [vmem:[%s256 + $0x138] sm:$0xff] %v1145
        %1242 = vst [vmem:[%s256 + $0x140] sm:$0xff] %v1146
        %1243 = vst [vmem:[%s256 + $0x148] sm:$0xff] %v1147
        %1244 = vst [vmem:[%s256 + $0x150] sm:$0xff] %v1148
        %1245 = vst [vmem:[%s256 + $0x158] sm:$0xff] %v1149
        %1246 = vst [vmem:[%s256 + $0x160] sm:$0xff] %v1150
        %1247 = vst [vmem:[%s256 + $0x168] sm:$0xff] %v1151
        %1248 = vst [vmem:[%s256 + $0x170] sm:$0xff] %v1152
        %1249 = vst [vmem:[%s256 + $0x178] sm:$0xff] %v1153
        %1250 = vst [vmem:[%s256 + $0x180] sm:$0xff] %v1154
        %1251 = vst [vmem:[%s256 + $0x188] sm:$0xff] %v1155
        %1252 = vst [vmem:[%s256 + $0x190] sm:$0xff] %v1156
        %1253 = vst [vmem:[%s256 + $0x198] sm:$0xff] %v1157
        %1254 = vst [vmem:[%s256 + $0x1a0] sm:$0xff] %v1158
        %1255 = vst [vmem:[%s256 + $0x1a8] sm:$0xff] %v1159
        %1256 = vst [vmem:[%s256 + $0x1b0] sm:$0xff] %v1160
        %1257 = vst [vmem:[%s256 + $0x1b8] sm:$0xff] %v1161
        %1258 = vst [vmem:[%s256 + $0x1c0] sm:$0xff] %v1162
        %1259 = vst [vmem:[%s256 + $0x1c8] sm:$0xff] %v1163
        %1260 = vst [vmem:[%s256 + $0x1d0] sm:$0xff] %v1164
        %1261 = vst [vmem:[%s256 + $0x1d8] sm:$0xff] %v1165
        %1262 = vst [vmem:[%s256 + $0x1e0] sm:$0xff] %v1166
        %1263 = vst [vmem:[%s256 + $0x1e8] sm:$0xff] %v1167
        %1264 = vst [vmem:[%s256 + $0x1f0] sm:$0xff] %v1168
        %1265 = vst [vmem:[%s256 + $0x1f8] sm:$0xff] %v1169
        %1266 = vst [vmem:[%s256 + $0x200] sm:$0xff] %v1170
        %1267 = vst [vmem:[%s256 + $0x208] sm:$0xff] %v1171
        %1268 = vst [vmem:[%s256 + $0x210] sm:$0xff] %v1172
        %1269 = vst [vmem:[%s256 + $0x218] sm:$0xff] %v1173
        %1270 = vst [vmem:[%s256 + $0x220] sm:$0xff] %v1174
        %1271 = vst [vmem:[%s256 + $0x228] sm:$0xff] %v1175
        %1272 = vst [vmem:[%s256 + $0x230] sm:$0xff] %v1176
        %1273 = vst [vmem:[%s256 + $0x238] sm:$0xff] %v1177
        %1274 = vst [vmem:[%s256 + $0x240] sm:$0xff] %v1178
        %1275 = vst [vmem:[%s256 + $0x248] sm:$0xff] %v1179
        %1276 = vst [vmem:[%s256 + $0x250] sm:$0xff] %v1180
        %1277 = vst [vmem:[%s256 + $0x258] sm:$0xff] %v1181
        %1278 = vst [vmem:[%s256 + $0x260] sm:$0xff] %v1182
        %1279 = vst [vmem:[%s256 + $0x268] sm:$0xff] %v1183
        %1280 = vst [vmem:[%s256 + $0x270] sm:$0xff] %v1184
        %1281 = vst [vmem:[%s256 + $0x278] sm:$0xff] %v1185
        %1282 = vst [vmem:[%s256 + $0x280] sm:$0xff] %v1186
        %1283 = vst [vmem:[%s256 + $0x288] sm:$0xff] %v1187
        %1284 = vst [vmem:[%s256 + $0x290] sm:$0xff] %v1188
        %1285 = vst [vmem:[%s256 + $0x298] sm:$0xff] %v1189
        %1286 = vst [vmem:[%s256 + $0x2a0] sm:$0xff] %v1190
        %1287 = vst [vmem:[%s256 + $0x2a8] sm:$0xff] %v1191
        %1288 = vst [vmem:[%s256 + $0x2b0] sm:$0xff] %v1192
        %1289 = vst [vmem:[%s256 + $0x2b8] sm:$0xff] %v1193
        %1290 = vst [vmem:[%s256 + $0x2c0] sm:$0xff] %v1194
        %1291 = vst [vmem:[%s256 + $0x2c8] sm:$0xff] %v1195
        %1292 = vst [vmem:[%s256 + $0x2d0] sm:$0xff] %v1196
        %1293 = vst [vmem:[%s256 + $0x2d8] sm:$0xff] %v1197
        %1294 = vst [vmem:[%s256 + $0x2e0] sm:$0xff] %v1198
        %1295 = vst [vmem:[%s256 + $0x2e8] sm:$0xff] %v1199
        %1296 = vst [vmem:[%s256 + $0x2f0] sm:$0xff] %v1200
        %1297 = vst [vmem:[%s256 + $0x2f8] sm:$0xff] %v1201
        // Predicated region
        $region45: #{tpu_custom_call.1} parent=31 // pred_check
          %p1298 = pneg %p268
        $region46: #{tpu_custom_call.1} parent=31 // pred_check_branch
          %1300 = sbr.rel (%p1298) target = $region48
        $region47: #{tpu_custom_call.1} parent=31 // pred_region
          %v1301 = vld [vmem:[%s256] sm:$0xff]
          %v1302 = vld [vmem:[%s256 + $0x8] sm:$0xff]
          %v1303 = vld [vmem:[%s256 + $0x10] sm:$0xff]
          %v1304 = vld [vmem:[%s256 + $0x18] sm:$0xff]
          %v1305 = vld [vmem:[%s256 + $0x20] sm:$0xff]
          %v1306 = vld [vmem:[%s256 + $0x28] sm:$0xff]
          %v1307 = vld [vmem:[%s256 + $0x30] sm:$0xff]
          %v1308 = vld [vmem:[%s256 + $0x38] sm:$0xff]
          %v1309 = vld [vmem:[%s256 + $0x40] sm:$0xff]
          %v1310 = vld [vmem:[%s256 + $0x48] sm:$0xff]
          %v1311 = vld [vmem:[%s256 + $0x50] sm:$0xff]
          %v1312 = vld [vmem:[%s256 + $0x58] sm:$0xff]
          %v1313 = vld [vmem:[%s256 + $0x60] sm:$0xff]
          %v1314 = vld [vmem:[%s256 + $0x68] sm:$0xff]
          %v1315 = vld [vmem:[%s256 + $0x70] sm:$0xff]
          %v1316 = vld [vmem:[%s256 + $0x78] sm:$0xff]
          %v1317 = vld [vmem:[%s256 + $0x80] sm:$0xff]
          %v1318 = vld [vmem:[%s256 + $0x88] sm:$0xff]
          %v1319 = vld [vmem:[%s256 + $0x90] sm:$0xff]
          %v1320 = vld [vmem:[%s256 + $0x98] sm:$0xff]
          %v1321 = vld [vmem:[%s256 + $0xa0] sm:$0xff]
          %v1322 = vld [vmem:[%s256 + $0xa8] sm:$0xff]
          %v1323 = vld [vmem:[%s256 + $0xb0] sm:$0xff]
          %v1324 = vld [vmem:[%s256 + $0xb8] sm:$0xff]
          %v1325 = vld [vmem:[%s256 + $0xc0] sm:$0xff]
          %v1326 = vld [vmem:[%s256 + $0xc8] sm:$0xff]
          %v1327 = vld [vmem:[%s256 + $0xd0] sm:$0xff]
          %v1328 = vld [vmem:[%s256 + $0xd8] sm:$0xff]
          %v1329 = vld [vmem:[%s256 + $0xe0] sm:$0xff]
          %v1330 = vld [vmem:[%s256 + $0xe8] sm:$0xff]
          %v1331 = vld [vmem:[%s256 + $0xf0] sm:$0xff]
          %v1332 = vld [vmem:[%s256 + $0xf8] sm:$0xff]
          %v1333 = vld [vmem:[%s256 + $0x100] sm:$0xff]
          %v1334 = vld [vmem:[%s256 + $0x108] sm:$0xff]
          %v1335 = vld [vmem:[%s256 + $0x110] sm:$0xff]
          %v1336 = vld [vmem:[%s256 + $0x118] sm:$0xff]
          %v1337 = vld [vmem:[%s256 + $0x120] sm:$0xff]
          %v1338 = vld [vmem:[%s256 + $0x128] sm:$0xff]
          %v1339 = vld [vmem:[%s256 + $0x130] sm:$0xff]
          %v1340 = vld [vmem:[%s256 + $0x138] sm:$0xff]
          %v1341 = vld [vmem:[%s256 + $0x140] sm:$0xff]
          %v1342 = vld [vmem:[%s256 + $0x148] sm:$0xff]
          %v1343 = vld [vmem:[%s256 + $0x150] sm:$0xff]
          %v1344 = vld [vmem:[%s256 + $0x158] sm:$0xff]
          %v1345 = vld [vmem:[%s256 + $0x160] sm:$0xff]
          %v1346 = vld [vmem:[%s256 + $0x168] sm:$0xff]
          %v1347 = vld [vmem:[%s256 + $0x170] sm:$0xff]
          %v1348 = vld [vmem:[%s256 + $0x178] sm:$0xff]
          %v1349 = vld [vmem:[%s256 + $0x180] sm:$0xff]
          %v1350 = vld [vmem:[%s256 + $0x188] sm:$0xff]
          %v1351 = vld [vmem:[%s256 + $0x190] sm:$0xff]
          %v1352 = vld [vmem:[%s256 + $0x198] sm:$0xff]
          %v1353 = vld [vmem:[%s256 + $0x1a0] sm:$0xff]
          %v1354 = vld [vmem:[%s256 + $0x1a8] sm:$0xff]
          %v1355 = vld [vmem:[%s256 + $0x1b0] sm:$0xff]
          %v1356 = vld [vmem:[%s256 + $0x1b8] sm:$0xff]
          %v1357 = vld [vmem:[%s256 + $0x1c0] sm:$0xff]
          %v1358 = vld [vmem:[%s256 + $0x1c8] sm:$0xff]
          %v1359 = vld [vmem:[%s256 + $0x1d0] sm:$0xff]
          %v1360 = vld [vmem:[%s256 + $0x1d8] sm:$0xff]
          %v1361 = vld [vmem:[%s256 + $0x1e0] sm:$0xff]
          %v1362 = vld [vmem:[%s256 + $0x1e8] sm:$0xff]
          %v1363 = vld [vmem:[%s256 + $0x1f0] sm:$0xff]
          %v1364 = vld [vmem:[%s256 + $0x1f8] sm:$0xff]
          %v1365 = vld [vmem:[%s256 + $0x200] sm:$0xff]
          %v1366 = vld [vmem:[%s256 + $0x208] sm:$0xff]
          %v1367 = vld [vmem:[%s256 + $0x210] sm:$0xff]
          %v1368 = vld [vmem:[%s256 + $0x218] sm:$0xff]
          %v1369 = vld [vmem:[%s256 + $0x220] sm:$0xff]
          %v1370 = vld [vmem:[%s256 + $0x228] sm:$0xff]
          %v1371 = vld [vmem:[%s256 + $0x230] sm:$0xff]
          %v1372 = vld [vmem:[%s256 + $0x238] sm:$0xff]
          %v1373 = vld [vmem:[%s256 + $0x240] sm:$0xff]
          %v1374 = vld [vmem:[%s256 + $0x248] sm:$0xff]
          %v1375 = vld [vmem:[%s256 + $0x250] sm:$0xff]
          %v1376 = vld [vmem:[%s256 + $0x258] sm:$0xff]
          %v1377 = vld [vmem:[%s256 + $0x260] sm:$0xff]
          %v1378 = vld [vmem:[%s256 + $0x268] sm:$0xff]
          %v1379 = vld [vmem:[%s256 + $0x270] sm:$0xff]
          %v1380 = vld [vmem:[%s256 + $0x278] sm:$0xff]
          %v1381 = vld [vmem:[%s256 + $0x280] sm:$0xff]
          %v1382 = vld [vmem:[%s256 + $0x288] sm:$0xff]
          %v1383 = vld [vmem:[%s256 + $0x290] sm:$0xff]
          %v1384 = vld [vmem:[%s256 + $0x298] sm:$0xff]
          %v1385 = vld [vmem:[%s256 + $0x2a0] sm:$0xff]
          %v1386 = vld [vmem:[%s256 + $0x2a8] sm:$0xff]
          %v1387 = vld [vmem:[%s256 + $0x2b0] sm:$0xff]
          %v1388 = vld [vmem:[%s256 + $0x2b8] sm:$0xff]
          %v1389 = vld [vmem:[%s256 + $0x2c0] sm:$0xff]
          %v1390 = vld [vmem:[%s256 + $0x2c8] sm:$0xff]
          %v1391 = vld [vmem:[%s256 + $0x2d0] sm:$0xff]
          %v1392 = vld [vmem:[%s256 + $0x2d8] sm:$0xff]
          %v1393 = vld [vmem:[%s256 + $0x2e0] sm:$0xff]
          %v1394 = vld [vmem:[%s256 + $0x2e8] sm:$0xff]
          %v1395 = vld [vmem:[%s256 + $0x2f0] sm:$0xff]
          %v1396 = vld [vmem:[%s256 + $0x2f8] sm:$0xff]
          %v1397 = vld [vmem:[%s264] sm:$0x7]
          %v1399 = vlaneseq
          %v1400 = vshrl.u32 %v1399, 7
          %v1401 = vsub.s32 0, %v1400
          %v1402 = vrot.slane %v1397, %v1401
          %v1403 = vlaneseq
          %v1404 = vshrl.u32 %v1403, 7
          %v1405 = vsub.s32 1, %v1404
          %v1406 = vrot.slane %v1397, %v1405
          %v1407 = vlaneseq
          %v1408 = vshrl.u32 %v1407, 7
          %v1409 = vsub.s32 2, %v1408
          %v1410 = vrot.slane %v1397, %v1409
          %v1414 = vadd.f32 %v1301, %v1402
          %v1415 = vadd.f32 %v1302, %v1406
          %v1416 = vadd.f32 %v1303, %v1410
          %v1417 = vadd.f32 %v1304, %v1402
          %v1418 = vadd.f32 %v1305, %v1406
          %v1419 = vadd.f32 %v1306, %v1410
          %v1420 = vadd.f32 %v1307, %v1402
          %v1421 = vadd.f32 %v1308, %v1406
          %v1422 = vadd.f32 %v1309, %v1410
          %v1423 = vadd.f32 %v1310, %v1402
          %v1424 = vadd.f32 %v1311, %v1406
          %v1425 = vadd.f32 %v1312, %v1410
          %v1426 = vadd.f32 %v1313, %v1402
          %v1427 = vadd.f32 %v1314, %v1406
          %v1428 = vadd.f32 %v1315, %v1410
          %v1429 = vadd.f32 %v1316, %v1402
          %v1430 = vadd.f32 %v1317, %v1406
          %v1431 = vadd.f32 %v1318, %v1410
          %v1432 = vadd.f32 %v1319, %v1402
          %v1433 = vadd.f32 %v1320, %v1406
          %v1434 = vadd.f32 %v1321, %v1410
          %v1435 = vadd.f32 %v1322, %v1402
          %v1436 = vadd.f32 %v1323, %v1406
          %v1437 = vadd.f32 %v1324, %v1410
          %v1438 = vadd.f32 %v1325, %v1402
          %v1439 = vadd.f32 %v1326, %v1406
          %v1440 = vadd.f32 %v1327, %v1410
          %v1441 = vadd.f32 %v1328, %v1402
          %v1442 = vadd.f32 %v1329, %v1406
          %v1443 = vadd.f32 %v1330, %v1410
          %v1444 = vadd.f32 %v1331, %v1402
          %v1445 = vadd.f32 %v1332, %v1406
          %v1446 = vadd.f32 %v1333, %v1410
          %v1447 = vadd.f32 %v1334, %v1402
          %v1448 = vadd.f32 %v1335, %v1406
          %v1449 = vadd.f32 %v1336, %v1410
          %v1450 = vadd.f32 %v1337, %v1402
          %v1451 = vadd.f32 %v1338, %v1406
          %v1452 = vadd.f32 %v1339, %v1410
          %v1453 = vadd.f32 %v1340, %v1402
          %v1454 = vadd.f32 %v1341, %v1406
          %v1455 = vadd.f32 %v1342, %v1410
          %v1456 = vadd.f32 %v1343, %v1402
          %v1457 = vadd.f32 %v1344, %v1406
          %v1458 = vadd.f32 %v1345, %v1410
          %v1459 = vadd.f32 %v1346, %v1402
          %v1460 = vadd.f32 %v1347, %v1406
          %v1461 = vadd.f32 %v1348, %v1410
          %v1462 = vadd.f32 %v1349, %v1402
          %v1463 = vadd.f32 %v1350, %v1406
          %v1464 = vadd.f32 %v1351, %v1410
          %v1465 = vadd.f32 %v1352, %v1402
          %v1466 = vadd.f32 %v1353, %v1406
          %v1467 = vadd.f32 %v1354, %v1410
          %v1468 = vadd.f32 %v1355, %v1402
          %v1469 = vadd.f32 %v1356, %v1406
          %v1470 = vadd.f32 %v1357, %v1410
          %v1471 = vadd.f32 %v1358, %v1402
          %v1472 = vadd.f32 %v1359, %v1406
          %v1473 = vadd.f32 %v1360, %v1410
          %v1474 = vadd.f32 %v1361, %v1402
          %v1475 = vadd.f32 %v1362, %v1406
          %v1476 = vadd.f32 %v1363, %v1410
          %v1477 = vadd.f32 %v1364, %v1402
          %v1478 = vadd.f32 %v1365, %v1406
          %v1479 = vadd.f32 %v1366, %v1410
          %v1480 = vadd.f32 %v1367, %v1402
          %v1481 = vadd.f32 %v1368, %v1406
          %v1482 = vadd.f32 %v1369, %v1410
          %v1483 = vadd.f32 %v1370, %v1402
          %v1484 = vadd.f32 %v1371, %v1406
          %v1485 = vadd.f32 %v1372, %v1410
          %v1486 = vadd.f32 %v1373, %v1402
          %v1487 = vadd.f32 %v1374, %v1406
          %v1488 = vadd.f32 %v1375, %v1410
          %v1489 = vadd.f32 %v1376, %v1402
          %v1490 = vadd.f32 %v1377, %v1406
          %v1491 = vadd.f32 %v1378, %v1410
          %v1492 = vadd.f32 %v1379, %v1402
          %v1493 = vadd.f32 %v1380, %v1406
          %v1494 = vadd.f32 %v1381, %v1410
          %v1495 = vadd.f32 %v1382, %v1402
          %v1496 = vadd.f32 %v1383, %v1406
          %v1497 = vadd.f32 %v1384, %v1410
          %v1498 = vadd.f32 %v1385, %v1402
          %v1499 = vadd.f32 %v1386, %v1406
          %v1500 = vadd.f32 %v1387, %v1410
          %v1501 = vadd.f32 %v1388, %v1402
          %v1502 = vadd.f32 %v1389, %v1406
          %v1503 = vadd.f32 %v1390, %v1410
          %v1504 = vadd.f32 %v1391, %v1402
          %v1505 = vadd.f32 %v1392, %v1406
          %v1506 = vadd.f32 %v1393, %v1410
          %v1507 = vadd.f32 %v1394, %v1402
          %v1508 = vadd.f32 %v1395, %v1406
          %v1509 = vadd.f32 %v1396, %v1410
          %1510 = vst [vmem:[%s256] sm:$0xff] %v1414
          %1511 = vst [vmem:[%s256 + $0x8] sm:$0xff] %v1415
          %1512 = vst [vmem:[%s256 + $0x10] sm:$0xff] %v1416
          %1513 = vst [vmem:[%s256 + $0x18] sm:$0xff] %v1417
          %1514 = vst [vmem:[%s256 + $0x20] sm:$0xff] %v1418
          %1515 = vst [vmem:[%s256 + $0x28] sm:$0xff] %v1419
          %1516 = vst [vmem:[%s256 + $0x30] sm:$0xff] %v1420
          %1517 = vst [vmem:[%s256 + $0x38] sm:$0xff] %v1421
          %1518 = vst [vmem:[%s256 + $0x40] sm:$0xff] %v1422
          %1519 = vst [vmem:[%s256 + $0x48] sm:$0xff] %v1423
          %1520 = vst [vmem:[%s256 + $0x50] sm:$0xff] %v1424
          %1521 = vst [vmem:[%s256 + $0x58] sm:$0xff] %v1425
          %1522 = vst [vmem:[%s256 + $0x60] sm:$0xff] %v1426
          %1523 = vst [vmem:[%s256 + $0x68] sm:$0xff] %v1427
          %1524 = vst [vmem:[%s256 + $0x70] sm:$0xff] %v1428
          %1525 = vst [vmem:[%s256 + $0x78] sm:$0xff] %v1429
          %1526 = vst [vmem:[%s256 + $0x80] sm:$0xff] %v1430
          %1527 = vst [vmem:[%s256 + $0x88] sm:$0xff] %v1431
          %1528 = vst [vmem:[%s256 + $0x90] sm:$0xff] %v1432
          %1529 = vst [vmem:[%s256 + $0x98] sm:$0xff] %v1433
          %1530 = vst [vmem:[%s256 + $0xa0] sm:$0xff] %v1434
          %1531 = vst [vmem:[%s256 + $0xa8] sm:$0xff] %v1435
          %1532 = vst [vmem:[%s256 + $0xb0] sm:$0xff] %v1436
          %1533 = vst [vmem:[%s256 + $0xb8] sm:$0xff] %v1437
          %1534 = vst [vmem:[%s256 + $0xc0] sm:$0xff] %v1438
          %1535 = vst [vmem:[%s256 + $0xc8] sm:$0xff] %v1439
          %1536 = vst [vmem:[%s256 + $0xd0] sm:$0xff] %v1440
          %1537 = vst [vmem:[%s256 + $0xd8] sm:$0xff] %v1441
          %1538 = vst [vmem:[%s256 + $0xe0] sm:$0xff] %v1442
          %1539 = vst [vmem:[%s256 + $0xe8] sm:$0xff] %v1443
          %1540 = vst [vmem:[%s256 + $0xf0] sm:$0xff] %v1444
          %1541 = vst [vmem:[%s256 + $0xf8] sm:$0xff] %v1445
          %1542 = vst [vmem:[%s256 + $0x100] sm:$0xff] %v1446
          %1543 = vst [vmem:[%s256 + $0x108] sm:$0xff] %v1447
          %1544 = vst [vmem:[%s256 + $0x110] sm:$0xff] %v1448
          %1545 = vst [vmem:[%s256 + $0x118] sm:$0xff] %v1449
          %1546 = vst [vmem:[%s256 + $0x120] sm:$0xff] %v1450
          %1547 = vst [vmem:[%s256 + $0x128] sm:$0xff] %v1451
          %1548 = vst [vmem:[%s256 + $0x130] sm:$0xff] %v1452
          %1549 = vst [vmem:[%s256 + $0x138] sm:$0xff] %v1453
          %1550 = vst [vmem:[%s256 + $0x140] sm:$0xff] %v1454
          %1551 = vst [vmem:[%s256 + $0x148] sm:$0xff] %v1455
          %1552 = vst [vmem:[%s256 + $0x150] sm:$0xff] %v1456
          %1553 = vst [vmem:[%s256 + $0x158] sm:$0xff] %v1457
          %1554 = vst [vmem:[%s256 + $0x160] sm:$0xff] %v1458
          %1555 = vst [vmem:[%s256 + $0x168] sm:$0xff] %v1459
          %1556 = vst [vmem:[%s256 + $0x170] sm:$0xff] %v1460
          %1557 = vst [vmem:[%s256 + $0x178] sm:$0xff] %v1461
          %1558 = vst [vmem:[%s256 + $0x180] sm:$0xff] %v1462
          %1559 = vst [vmem:[%s256 + $0x188] sm:$0xff] %v1463
          %1560 = vst [vmem:[%s256 + $0x190] sm:$0xff] %v1464
          %1561 = vst [vmem:[%s256 + $0x198] sm:$0xff] %v1465
          %1562 = vst [vmem:[%s256 + $0x1a0] sm:$0xff] %v1466
          %1563 = vst [vmem:[%s256 + $0x1a8] sm:$0xff] %v1467
          %1564 = vst [vmem:[%s256 + $0x1b0] sm:$0xff] %v1468
          %1565 = vst [vmem:[%s256 + $0x1b8] sm:$0xff] %v1469
          %1566 = vst [vmem:[%s256 + $0x1c0] sm:$0xff] %v1470
          %1567 = vst [vmem:[%s256 + $0x1c8] sm:$0xff] %v1471
          %1568 = vst [vmem:[%s256 + $0x1d0] sm:$0xff] %v1472
          %1569 = vst [vmem:[%s256 + $0x1d8] sm:$0xff] %v1473
          %1570 = vst [vmem:[%s256 + $0x1e0] sm:$0xff] %v1474
          %1571 = vst [vmem:[%s256 + $0x1e8] sm:$0xff] %v1475
          %1572 = vst [vmem:[%s256 + $0x1f0] sm:$0xff] %v1476
          %1573 = vst [vmem:[%s256 + $0x1f8] sm:$0xff] %v1477
          %1574 = vst [vmem:[%s256 + $0x200] sm:$0xff] %v1478
          %1575 = vst [vmem:[%s256 + $0x208] sm:$0xff] %v1479
          %1576 = vst [vmem:[%s256 + $0x210] sm:$0xff] %v1480
          %1577 = vst [vmem:[%s256 + $0x218] sm:$0xff] %v1481
          %1578 = vst [vmem:[%s256 + $0x220] sm:$0xff] %v1482
          %1579 = vst [vmem:[%s256 + $0x228] sm:$0xff] %v1483
          %1580 = vst [vmem:[%s256 + $0x230] sm:$0xff] %v1484
          %1581 = vst [vmem:[%s256 + $0x238] sm:$0xff] %v1485
          %1582 = vst [vmem:[%s256 + $0x240] sm:$0xff] %v1486
          %1583 = vst [vmem:[%s256 + $0x248] sm:$0xff] %v1487
          %1584 = vst [vmem:[%s256 + $0x250] sm:$0xff] %v1488
          %1585 = vst [vmem:[%s256 + $0x258] sm:$0xff] %v1489
          %1586 = vst [vmem:[%s256 + $0x260] sm:$0xff] %v1490
          %1587 = vst [vmem:[%s256 + $0x268] sm:$0xff] %v1491
          %1588 = vst [vmem:[%s256 + $0x270] sm:$0xff] %v1492
          %1589 = vst [vmem:[%s256 + $0x278] sm:$0xff] %v1493
          %1590 = vst [vmem:[%s256 + $0x280] sm:$0xff] %v1494
          %1591 = vst [vmem:[%s256 + $0x288] sm:$0xff] %v1495
          %1592 = vst [vmem:[%s256 + $0x290] sm:$0xff] %v1496
          %1593 = vst [vmem:[%s256 + $0x298] sm:$0xff] %v1497
          %1594 = vst [vmem:[%s256 + $0x2a0] sm:$0xff] %v1498
          %1595 = vst [vmem:[%s256 + $0x2a8] sm:$0xff] %v1499
          %1596 = vst [vmem:[%s256 + $0x2b0] sm:$0xff] %v1500
          %1597 = vst [vmem:[%s256 + $0x2b8] sm:$0xff] %v1501
          %1598 = vst [vmem:[%s256 + $0x2c0] sm:$0xff] %v1502
          %1599 = vst [vmem:[%s256 + $0x2c8] sm:$0xff] %v1503
          %1600 = vst [vmem:[%s256 + $0x2d0] sm:$0xff] %v1504
          %1601 = vst [vmem:[%s256 + $0x2d8] sm:$0xff] %v1505
          %1602 = vst [vmem:[%s256 + $0x2e0] sm:$0xff] %v1506
          %1603 = vst [vmem:[%s256 + $0x2e8] sm:$0xff] %v1507
          %1604 = vst [vmem:[%s256 + $0x2f0] sm:$0xff] %v1508
          %1605 = vst [vmem:[%s256 + $0x2f8] sm:$0xff] %v1509
        $region48: #{tpu_custom_call.1} parent=31 // pred_fallthru
          _
        %s1606 = sand.u32 %s132, 1
        %s1607 = scalar_lea.sflag [#allocation4], %s1606
        %s1608 = sand.u32 %s132, 1
        %s1609 = smul.addr %s1608, 768
        %s1610 = scalar_lea.vmem [#allocation7], %s1609
        // Predicated region
        $region49: #{tpu_custom_call.1} parent=31 // pred_check
          %p1611 = pneg %p142
        $region50: #{tpu_custom_call.1} parent=31 // pred_check_branch
          %1613 = sbr.rel (%p1611) target = $region52
        $region51: #{tpu_custom_call.1} parent=31 // pred_region
          %s1614 = smul.u32 32, %s26
          %s1615 = smul.u32 3, %s27
          %s1617 = ssub.s32 12288, 12288
          %1618 = vsyncadd %s1607, %s1617
          %s1619 = smul.addr %s1614, 6
          %s1620 = sadd.s32 %s1615, %s1619
          %s1621 = smul.addr %s1620, 128
          %s1622 = scalar_lea.hbm %s3, %s1621
          %s1623 = sshll.u32 %s1610, 4
          %s1624 = int_to_ptr.vmem [resolvable:$true] %s1623
          %1629 = dma.vmem_to_hbm [thread:$0]  %s1624, 12288, %s1622, %s1607, 384, 768, 24
        $region52: #{tpu_custom_call.1} parent=31 // pred_fallthru
          _
      $region32: #{tpu_custom_call.1} parent=5 // pred_fallthru
        _
      %p1630 = scmp.le.s32.totalorder 2, %s16
      // Predicated region
      $region53: #{tpu_custom_call.1} parent=5 // pred_check
        %p1631 = pneg %p1630
      $region54: #{tpu_custom_call.1} parent=5 // pred_check_branch
        %1633 = sbr.rel (%p1631) target = $region56
      $region55: #{tpu_custom_call.1} parent=5 // pred_region
        %s1634 = ssub.s32 %s16, 2
        // Predicated region
        $region57: #{tpu_custom_call.1} parent=55 // pred_check
          %p1635 = pneg %p148
        $region58: #{tpu_custom_call.1} parent=55 // pred_check_branch
          %1637 = sbr.rel (%p1635) target = $region60
        $region59: #{tpu_custom_call.1} parent=55 // pred_region
          %s1638 = sand.u32 %s133, 1
          %s1639 = scalar_lea.sflag [#allocation4], %s1638
          %s1640 = sand.u32 %s133, 1
          %s1641 = smul.addr %s1640, 768
          %s1642 = scalar_lea.vmem [#allocation7], %s1641
          %1643 = dma.done %s1639, 12288
        $region60: #{tpu_custom_call.1} parent=55 // pred_fallthru
          _
      $region56: #{tpu_custom_call.1} parent=5 // pred_fallthru
        _
    $region6: #{tpu_custom_call.1} parent=1 // loop_footer
      %s20 = sadd.s32 1, %s16
    $region7: #{tpu_custom_call.1} parent=1 // loop_footer_branch
      %15 = sbr.rel target = $region3
    $region8: #{tpu_custom_call.1} parent=1 // loop_exit
      _
    %1644 = vsyncpa [#allocation3], 1
    %s1645 = scalar_lea.sflag [#allocation3], 1
    %1646 = vsyncpa %s1645, 1
    %1647 = vsyncpa [#allocation6], 1
    %s1648 = scalar_lea.sflag [#allocation6], 1
    %1649 = vsyncpa %s1648, 1
    %1650 = vsyncpa [#allocation4], 1
    %s1651 = scalar_lea.sflag [#allocation4], 1
    %1652 = vsyncpa %s1651, 1

</llo_original>
